<compile_context>
chip_gen: v7x
topology: tpu7x:2x2x1
jax: 0.10.0
libtpu: 0.0.40
codegen_flags: <defaults>
</compile_context>

<pallas_src>
import functools
import math

import jax
import jax.numpy as jnp
from jax.experimental import pallas as pl
from jax.experimental.pallas import tpu as pltpu

# ---- model hyperparameters (match the PyTorch module) ----------------------
D_MODEL = 128
DIM_FF = 512
MAX_SEQ_LEN = 10
NHEAD = 8
HEAD_DIM = D_MODEL // NHEAD
NUM_LAYERS = 3
VOCAB = 28
VOCAB_PAD = 128          # pad fc_out / embedding lane dims to 128 (lane-dense)
LN_EPS = 1e-5


def _layer_norm(x, w, b):
    # one-pass statistics: single read of x, sum and sum-of-squares
    mu = jnp.mean(x, axis=-1, keepdims=True)
    ms = jnp.mean(x * x, axis=-1, keepdims=True)
    var = ms - mu * mu
    return (x - mu) * jax.lax.rsqrt(var + LN_EPS) * w + b


def _head_masks():
    """Head-membership masks built from iota (no input DMA).

    maskT_s[d, h] = 1/sqrt(head_dim) if lane d belongs to head h else 0
    mask[h, d]    = 1                if lane d belongs to head h else 0
    The attention scale is folded into maskT_s (removes L^2 VPU multiplies).
    """
    scale = 1.0 / math.sqrt(HEAD_DIM)
    d = jax.lax.broadcasted_iota(jnp.int32, (D_MODEL, NHEAD), 0)
    h = jax.lax.broadcasted_iota(jnp.int32, (D_MODEL, NHEAD), 1)
    in_head = (d >= h * HEAD_DIM) & (d < (h + 1) * HEAD_DIM)
    maskT_s = in_head.astype(jnp.float32) * scale                 # (D, NHEAD)

    h2 = jax.lax.broadcasted_iota(jnp.int32, (NHEAD, D_MODEL), 0)
    d2 = jax.lax.broadcasted_iota(jnp.int32, (NHEAD, D_MODEL), 1)
    in_head2 = (d2 >= h2 * HEAD_DIM) & (d2 < (h2 + 1) * HEAD_DIM)
    mask = in_head2.astype(jnp.float32)                           # (NHEAD, D)
    return maskT_s, mask


# ---- the Pallas kernel ------------------------------------------------------
def encoder_kernel(tok_ref, pos_ref, emb_ref,
                   ipw_ref, ipb_ref, opw_ref, opb_ref,
                   ln1w_ref, ln1b_ref, l1w_ref, l1b_ref,
                   l2w_ref, l2b_ref, ln2w_ref, ln2b_ref,
                   fcw_ref, fcb_ref,
                   o_ref, src_ref, *, L, N):
    """One encoder layer per grid step + fused embedding (step 0) and fc_out
    (last step).  Row layout of the activation slab: row = l*N + n."""
    D = D_MODEL
    layer = pl.program_id(0)
    maskT_s, mask = _head_masks()

    @pl.when(layer == 0)
    def _():
        # Fused embedding gather (one-hot MXU matmul) + positional encoding.
        tok = tok_ref[...]                                       # (L*N, 1) i32
        lane = jax.lax.broadcasted_iota(jnp.int32, (L * N, VOCAB_PAD), 1)
        onehot = (lane == tok).astype(jnp.float32)               # (L*N, 128)
        src_ref[...] = jnp.dot(onehot, emb_ref[...],
                               preferred_element_type=jnp.float32) + pos_ref[...]

    src = src_ref[...]                                           # (L*N, D)

    # ---- multi-head self-attention, attends over the L axis ---------------
    qkv = jnp.dot(src, ipw_ref[0],
                  preferred_element_type=jnp.float32) + ipb_ref[0]
    q = qkv[:, 0:D]
    k = qkv[:, D:2 * D]
    v = qkv[:, 2 * D:3 * D]
    q3 = q.reshape(L, N, D)
    k3 = k.reshape(L, N, D)
    v3 = v.reshape(L, N, D)

    # scores s[li, m, n, h] for ALL (li, m) pairs with ONE mask matmul
    prod = (q3[:, None, :, :] * k3[None, :, :, :]).reshape(L * L * N, D)
    s = jnp.dot(prod, maskT_s, preferred_element_type=jnp.float32)  # (L*L*N, 8)
    s4 = s.reshape(L, L, N, NHEAD)                                   # [li,m,n,h]

    # softmax over the key axis m (leading-axis max / sum: pure VPU)
    smax = jnp.max(s4, axis=1, keepdims=True)
    p4 = jnp.exp(s4 - smax)
    denom = jnp.sum(p4, axis=1, keepdims=True)
    w4 = p4 * pl.reciprocal(denom, approx=True)                      # (L,L,N,8)

    # broadcast per-head weights across the head's 16 lanes with ONE matmul,
    # then weighted sum over m (strided sublane sum) -- no concatenate.
    w_full = jnp.dot(w4.reshape(L * L * N, NHEAD), mask,
                     preferred_element_type=jnp.float32)             # (L*L*N, D)
    ctx = jnp.sum(w_full.reshape(L, L, N, D) * v3[None, :, :, :], axis=1)
    attn = ctx.reshape(L * N, D)

    attn = jnp.dot(attn, opw_ref[0],
                   preferred_element_type=jnp.float32) + opb_ref[0]
    x = _layer_norm(src + attn, ln1w_ref[0], ln1b_ref[0])

    # ---- feed-forward (dropout = eval-mode identity) -----------------------
    hid = jnp.dot(x, l1w_ref[0],
                  preferred_element_type=jnp.float32) + l1b_ref[0]
    hid = jnp.maximum(hid, 0.0)                                      # ReLU
    ff = jnp.dot(hid, l2w_ref[0],
                 preferred_element_type=jnp.float32) + l2b_ref[0]
    x = _layer_norm(x + ff, ln2w_ref[0], ln2b_ref[0])
    src_ref[...] = x                                                 # carry

    @pl.when(layer == NUM_LAYERS - 1)
    def _():
        # final projection to (lane-padded) vocab
        o_ref[...] = jnp.dot(x, fcw_ref[...],
                             preferred_element_type=jnp.float32) + fcb_ref[...]


# ---- wrapper ----------------------------------------------------------------
def _full_spec(shape):
    nd = len(shape)
    return pl.BlockSpec(shape, lambda l, _nd=nd: (0,) * _nd)


def _layer_spec(shape):
    # stacked (NUM_LAYERS, a, b) weight -> one layer slice per grid step
    return pl.BlockSpec((1,) + tuple(shape[1:]), lambda l: (l, 0, 0))


def hangman_transformer_forward(tokens, params):
    B, S = tokens.shape
    BS = B * S
    tok = tokens.reshape(BS, 1).astype(jnp.int32)
    # tiny glue: tile the (static) positional table across the batch rows
    pos = jnp.broadcast_to(params["pos"][None, :S, :],
                           (B, S, D_MODEL)).reshape(BS, D_MODEL)

    kernel = functools.partial(encoder_kernel, L=B, N=S)

    layer_keys = ("ipw", "ipb", "opw", "opb", "ln1w", "ln1b",
                  "l1w", "l1b", "l2w", "l2b", "ln2w", "ln2b")
    ins = (tok, pos, params["emb_pad"]) + tuple(params[k] for k in layer_keys) \
        + (params["fcw_pad"], params["fcb_pad"])

    specs = ([_full_spec(tok.shape), _full_spec(pos.shape),
              _full_spec(params["emb_pad"].shape)]
             + [_layer_spec(params[k].shape) for k in layer_keys]
             + [_full_spec(params["fcw_pad"].shape),
                _full_spec(params["fcb_pad"].shape)])

    # TODO(synk): for serving, keep the ~2.6 MB of stacked weights resident in
    # VMEM across calls (cross-call prefetch) and shard S across the two v7x
    # TensorCores with a parallel grid axis; not needed at this test size.
    out = pl.pallas_call(
        kernel,
        out_shape=jax.ShapeDtypeStruct((BS, VOCAB_PAD), jnp.float32),
        grid=(NUM_LAYERS,),
        in_specs=specs,
        out_specs=pl.BlockSpec((BS, VOCAB_PAD), lambda l: (0, 0)),
        scratch_shapes=[pltpu.VMEM((BS, D_MODEL), jnp.float32)],
        compiler_params=pltpu.CompilerParams(
            dimension_semantics=("arbitrary",)),
    )(*ins)

    return out[:, :VOCAB].reshape(B, S, VOCAB)


# ---- deterministic parameter construction -----------------------------------
def make_positional_encoding():
    pos = jnp.arange(MAX_SEQ_LEN, dtype=jnp.float32)[:, None]
    div = jnp.exp(jnp.arange(0, D_MODEL, 2, dtype=jnp.float32)
                  * (-math.log(10000.0) / D_MODEL))
    pe = jnp.zeros((MAX_SEQ_LEN, D_MODEL), jnp.float32)
    pe = pe.at[:, 0::2].set(jnp.sin(pos * div))
    pe = pe.at[:, 1::2].set(jnp.cos(pos * div))
    return pe


def init_params(key):
    ks = jax.random.split(key, 12)

    def nrm(k, shape, s=0.02):
        return jax.random.normal(k, shape, jnp.float32) * s

    p = {}
    p["emb"] = jax.random.normal(ks[0], (VOCAB, D_MODEL), jnp.float32)
    p["emb_pad"] = jnp.zeros((VOCAB_PAD, D_MODEL),
                             jnp.float32).at[:VOCAB].set(p["emb"])
    p["pos"] = make_positional_encoding()
    # per-layer weights stacked along a leading layer axis; linear weights are
    # stored already transposed ((in, out)) so the kernel does x @ W.
    p["ipw"] = nrm(ks[1], (NUM_LAYERS, D_MODEL, 3 * D_MODEL))
    p["ipb"] = nrm(ks[2], (NUM_LAYERS, 1, 3 * D_MODEL))
    p["opw"] = nrm(ks[3], (NUM_LAYERS, D_MODEL, D_MODEL))
    p["opb"] = nrm(ks[4], (NUM_LAYERS, 1, D_MODEL))
    p["ln1w"] = jnp.ones((NUM_LAYERS, 1, D_MODEL), jnp.float32)
    p["ln1b"] = jnp.zeros((NUM_LAYERS, 1, D_MODEL), jnp.float32)
    p["l1w"] = nrm(ks[5], (NUM_LAYERS, D_MODEL, DIM_FF))
    p["l1b"] = nrm(ks[6], (NUM_LAYERS, 1, DIM_FF))
    p["l2w"] = nrm(ks[7], (NUM_LAYERS, DIM_FF, D_MODEL))
    p["l2b"] = nrm(ks[8], (NUM_LAYERS, 1, D_MODEL))
    p["ln2w"] = jnp.ones((NUM_LAYERS, 1, D_MODEL), jnp.float32)
    p["ln2b"] = jnp.zeros((NUM_LAYERS, 1, D_MODEL), jnp.float32)

    fcw = nrm(ks[9], (D_MODEL, VOCAB))
    fcb = nrm(ks[10], (VOCAB,))
    p["fcw"] = fcw
    p["fcb"] = fcb
    p["fcw_pad"] = jnp.zeros((D_MODEL, VOCAB_PAD),
                             jnp.float32).at[:, :VOCAB].set(fcw)
    p["fcb_pad"] = jnp.zeros((1, VOCAB_PAD),
                             jnp.float32).at[0, :VOCAB].set(fcb)
    return p


# ---- pure-JAX reference (mirrors PyTorch eval-mode semantics) ---------------
def _ref_layer_norm(x, w, b):
    mu = jnp.mean(x, axis=-1, keepdims=True)
    var = jnp.mean((x - mu) ** 2, axis=-1, keepdims=True)
    return (x - mu) * jax.lax.rsqrt(var + LN_EPS) * w + b


def ref_forward(tokens, p):
    B, S = tokens.shape
    src = p["emb"][tokens] + p["pos"][None, :S, :]     # (L=B, N=S, D)
    L, N, D = src.shape
    for l in range(NUM_LAYERS):
        qkv = src @ p["ipw"][l] + p["ipb"][l][0]
        q, k, v = qkv[..., :D], qkv[..., D:2 * D], qkv[..., 2 * D:]
        qh = q.reshape(L, N, NHEAD, HEAD_DIM)
        kh = k.reshape(L, N, NHEAD, HEAD_DIM)
        vh = v.reshape(L, N, NHEAD, HEAD_DIM)
        scores = jnp.einsum("lnhd,mnhd->nhlm", qh, kh) / math.sqrt(HEAD_DIM)
        w = jax.nn.softmax(scores, axis=-1)
        attn = jnp.einsum("nhlm,mnhd->lnhd", w, vh).reshape(L, N, D)
        attn = attn @ p["opw"][l] + p["opb"][l][0]
        src = _ref_layer_norm(src + attn, p["ln1w"][l][0], p["ln1b"][l][0])
        h = jax.nn.relu(src @ p["l1w"][l] + p["l1b"][l][0])
        ff = h @ p["l2w"][l] + p["l2b"][l][0]
        src = _ref_layer_norm(src + ff, p["ln2w"][l][0], p["ln2b"][l][0])
    return src @ p["fcw"] + p["fcb"]


if __name__ == "__main__":
    key = jax.random.PRNGKey(0)
    pkey, xkey = jax.random.split(key)
    params = init_params(pkey)

    B, S = 2, 8                                  # small shapes (S <= max_seq_len)
    tokens = jax.random.randint(xkey, (B, S), 0, VOCAB, dtype=jnp.int32)

    logits = jax.block_until_ready(hangman_transformer_forward(tokens, params))
    ref = jax.block_until_ready(ref_forward(tokens, params))

    assert logits.shape == (B, S, VOCAB)
    assert bool(jnp.all(jnp.isfinite(logits)))
    assert bool(jnp.allclose(logits, ref, atol=5e-2, rtol=5e-2)), float(
        jnp.max(jnp.abs(logits - ref)))

    print("KERNEL_OK")
</pallas_src>

<mosaic_0001>
module attributes {stable_mosaic.version = 11 : i64} {
  func.func @encoder_kernel(%arg0: i32, %arg1: memref<16x1xi32, #tpu.memory_space<vmem>>, %arg2: memref<16x128xf32, #tpu.memory_space<vmem>>, %arg3: memref<128x128xf32, #tpu.memory_space<vmem>>, %arg4: memref<1x128x384xf32, #tpu.memory_space<vmem>>, %arg5: memref<1x1x384xf32, #tpu.memory_space<vmem>>, %arg6: memref<1x128x128xf32, #tpu.memory_space<vmem>>, %arg7: memref<1x1x128xf32, #tpu.memory_space<vmem>>, %arg8: memref<1x1x128xf32, #tpu.memory_space<vmem>>, %arg9: memref<1x1x128xf32, #tpu.memory_space<vmem>>, %arg10: memref<1x128x512xf32, #tpu.memory_space<vmem>>, %arg11: memref<1x1x512xf32, #tpu.memory_space<vmem>>, %arg12: memref<1x512x128xf32, #tpu.memory_space<vmem>>, %arg13: memref<1x1x128xf32, #tpu.memory_space<vmem>>, %arg14: memref<1x1x128xf32, #tpu.memory_space<vmem>>, %arg15: memref<1x1x128xf32, #tpu.memory_space<vmem>>, %arg16: memref<128x128xf32, #tpu.memory_space<vmem>>, %arg17: memref<1x128xf32, #tpu.memory_space<vmem>>, %arg18: memref<16x128xf32, #tpu.memory_space<vmem>>, %arg19: memref<16x128xf32, #tpu.memory_space<vmem>>) attributes {dimension_semantics = [#tpu.dimension_semantics<arbitrary>], iteration_bounds = array<i64: 3>, scalar_prefetch = 0 : i64, scratch_operands = 1 : i64, tpu.core_type = #tpu.core_type<tc>, window_params = [{pipeline_mode = #tpu.pipeline_mode<synchronous>, transform_indices = @transform_0, window_bounds = array<i64: 16, 1>}, {pipeline_mode = #tpu.pipeline_mode<synchronous>, transform_indices = @transform_1, window_bounds = array<i64: 16, 128>}, {pipeline_mode = #tpu.pipeline_mode<synchronous>, transform_indices = @transform_2, window_bounds = array<i64: 128, 128>}, {transform_indices = @transform_3, window_bounds = array<i64: 1, 128, 384>}, {transform_indices = @transform_4, window_bounds = array<i64: 1, 1, 384>}, {transform_indices = @transform_5, window_bounds = array<i64: 1, 128, 128>}, {transform_indices = @transform_6, window_bounds = array<i64: 1, 1, 128>}, {transform_indices = @transform_7, window_bounds = array<i64: 1, 1, 128>}, {transform_indices = @transform_8, window_bounds = array<i64: 1, 1, 128>}, {transform_indices = @transform_9, window_bounds = array<i64: 1, 128, 512>}, {transform_indices = @transform_10, window_bounds = array<i64: 1, 1, 512>}, {transform_indices = @transform_11, window_bounds = array<i64: 1, 512, 128>}, {transform_indices = @transform_12, window_bounds = array<i64: 1, 1, 128>}, {transform_indices = @transform_13, window_bounds = array<i64: 1, 1, 128>}, {transform_indices = @transform_14, window_bounds = array<i64: 1, 1, 128>}, {pipeline_mode = #tpu.pipeline_mode<synchronous>, transform_indices = @transform_15, window_bounds = array<i64: 128, 128>}, {pipeline_mode = #tpu.pipeline_mode<synchronous>, transform_indices = @transform_16, window_bounds = array<i64: 1, 128>}, {pipeline_mode = #tpu.pipeline_mode<synchronous>, transform_indices = @transform_17, window_bounds = array<i64: 16, 128>}]} {
    %0 = tpu.iota {dimensions = array<i32: 0>} : vector<128x8xi32>
    %1 = tpu.iota {dimensions = array<i32: 1>} : vector<128x8xi32>
    %c16_i32 = arith.constant 16 : i32
    %2 = vector.broadcast %c16_i32 : i32 to vector<128x8xi32>
    %3 = arith.muli %1, %2 : vector<128x8xi32>
    %4 = arith.cmpi sge, %0, %3 : vector<128x8xi32>
    %c1_i32 = arith.constant 1 : i32
    %5 = vector.broadcast %c1_i32 : i32 to vector<128x8xi32>
    %6 = arith.addi %1, %5 : vector<128x8xi32>
    %c16_i32_0 = arith.constant 16 : i32
    %7 = vector.broadcast %c16_i32_0 : i32 to vector<128x8xi32>
    %8 = arith.muli %6, %7 : vector<128x8xi32>
    %9 = arith.cmpi slt, %0, %8 : vector<128x8xi32>
    %10 = arith.andi %4, %9 : vector<128x8xi1>
    %11 = arith.extui %10 : vector<128x8xi1> to vector<128x8xi32>
    %12 = arith.sitofp %11 : vector<128x8xi32> to vector<128x8xf32>
    %cst = arith.constant 2.500000e-01 : f32
    %13 = vector.broadcast %cst : f32 to vector<128x8xf32>
    %14 = arith.mulf %12, %13 : vector<128x8xf32>
    %15 = tpu.iota {dimensions = array<i32: 0>} : vector<8x128xi32>
    %16 = tpu.iota {dimensions = array<i32: 1>} : vector<8x128xi32>
    %c16_i32_1 = arith.constant 16 : i32
    %17 = vector.broadcast %c16_i32_1 : i32 to vector<8x128xi32>
    %18 = arith.muli %15, %17 : vector<8x128xi32>
    %19 = arith.cmpi sge, %16, %18 : vector<8x128xi32>
    %c1_i32_2 = arith.constant 1 : i32
    %20 = vector.broadcast %c1_i32_2 : i32 to vector<8x128xi32>
    %21 = arith.addi %15, %20 : vector<8x128xi32>
    %c16_i32_3 = arith.constant 16 : i32
    %22 = vector.broadcast %c16_i32_3 : i32 to vector<8x128xi32>
    %23 = arith.muli %21, %22 : vector<8x128xi32>
    %24 = arith.cmpi slt, %16, %23 : vector<8x128xi32>
    %25 = arith.andi %19, %24 : vector<8x128xi1>
    %26 = arith.extui %25 : vector<8x128xi1> to vector<8x128xi32>
    %27 = arith.sitofp %26 : vector<8x128xi32> to vector<8x128xf32>
    %c0_i32 = arith.constant 0 : i32
    %28 = arith.cmpi eq, %arg0, %c0_i32 : i32
    %29 = arith.extui %28 : i1 to i32
    %c0_i32_4 = arith.constant 0 : i32
    %30 = arith.cmpi ne, %29, %c0_i32_4 : i32
    scf.if %30 {
      %c0_65 = arith.constant 0 : index
      %c0_66 = arith.constant 0 : index
      %152 = vector.load %arg1[%c0_65, %c0_66] : memref<16x1xi32, #tpu.memory_space<vmem>>, vector<16x1xi32>
      %153 = tpu.iota {dimensions = array<i32: 1>} : vector<16x128xi32>
      %154 = vector.broadcast %152 : vector<16x1xi32> to vector<16x128xi32>
      %155 = arith.cmpi eq, %153, %154 : vector<16x128xi32>
      %156 = arith.extui %155 : vector<16x128xi1> to vector<16x128xi32>
      %157 = arith.sitofp %156 : vector<16x128xi32> to vector<16x128xf32>
      %c0_67 = arith.constant 0 : index
      %c0_68 = arith.constant 0 : index
      %158 = vector.load %arg3[%c0_67, %c0_68] : memref<128x128xf32, #tpu.memory_space<vmem>>, vector<128x128xf32>
      %cst_69 = arith.constant dense<0.000000e+00> : vector<16x128xf32>
      %159 = tpu.matmul %157, %158, %cst_69 {dimension_numbers = #tpu.dot_dimension_numbers<[1], [0], [0], [1], [0, 0, 1, 1], [], []>} : vector<16x128xf32>, vector<128x128xf32>, vector<16x128xf32> -> vector<16x128xf32>
      %c0_70 = arith.constant 0 : index
      %c0_71 = arith.constant 0 : index
      %160 = vector.load %arg2[%c0_70, %c0_71] : memref<16x128xf32, #tpu.memory_space<vmem>>, vector<16x128xf32>
      %161 = arith.addf %159, %160 : vector<16x128xf32>
      %c0_72 = arith.constant 0 : index
      %c0_73 = arith.constant 0 : index
      %162 = vector.load %arg19[%c0_72, %c0_73] : memref<16x128xf32, #tpu.memory_space<vmem>>, vector<16x128xf32>
      tpu.vector_store %arg19[%c0_72, %c0_73], %161 {strides = array<i32>} : memref<16x128xf32, #tpu.memory_space<vmem>>, vector<16x128xf32>,
    } else {
    }
    %c0 = arith.constant 0 : index
    %c0_5 = arith.constant 0 : index
    %31 = vector.load %arg19[%c0, %c0_5] : memref<16x128xf32, #tpu.memory_space<vmem>>, vector<16x128xf32>
    %c0_6 = arith.constant 0 : index
    %c0_7 = arith.constant 0 : index
    %c0_8 = arith.constant 0 : index
    %32 = vector.load %arg4[%c0_6, %c0_7, %c0_8] : memref<1x128x384xf32, #tpu.memory_space<vmem>>, vector<1x128x384xf32>
    %33 = vector.shape_cast %32 : vector<1x128x384xf32> to vector<128x384xf32>
    %cst_9 = arith.constant dense<0.000000e+00> : vector<16x384xf32>
    %34 = tpu.matmul %31, %33, %cst_9 {dimension_numbers = #tpu.dot_dimension_numbers<[1], [0], [0], [1], [0, 0, 1, 1], [], []>} : vector<16x128xf32>, vector<128x384xf32>, vector<16x384xf32> -> vector<16x384xf32>
    %c0_10 = arith.constant 0 : index
    %c0_11 = arith.constant 0 : index
    %c0_12 = arith.constant 0 : index
    %35 = vector.load %arg5[%c0_10, %c0_11, %c0_12] : memref<1x1x384xf32, #tpu.memory_space<vmem>>, vector<1x1x384xf32>
    %36 = vector.shape_cast %35 : vector<1x1x384xf32> to vector<1x384xf32>
    %37 = vector.broadcast %36 : vector<1x384xf32> to vector<16x384xf32>
    %38 = arith.addf %34, %37 : vector<16x384xf32>
    %39 = vector.extract_strided_slice %38 {offsets = [0, 0], sizes = [16, 128], strides = [1, 1]} : vector<16x384xf32> to vector<16x128xf32>
    %40 = vector.extract_strided_slice %38 {offsets = [0, 128], sizes = [16, 128], strides = [1, 1]} : vector<16x384xf32> to vector<16x128xf32>
    %41 = vector.extract_strided_slice %38 {offsets = [0, 256], sizes = [16, 128], strides = [1, 1]} : vector<16x384xf32> to vector<16x128xf32>
    %42 = vector.shape_cast %39 : vector<16x128xf32> to vector<2x8x128xf32>
    %43 = vector.shape_cast %40 : vector<16x128xf32> to vector<2x8x128xf32>
    %44 = vector.shape_cast %41 : vector<16x128xf32> to vector<2x8x128xf32>
    %45 = vector.shape_cast %42 : vector<2x8x128xf32> to vector<2x1x8x128xf32>
    %46 = vector.shape_cast %43 : vector<2x8x128xf32> to vector<1x2x8x128xf32>
    %47 = vector.broadcast %45 : vector<2x1x8x128xf32> to vector<2x2x8x128xf32>
    %48 = vector.broadcast %46 : vector<1x2x8x128xf32> to vector<2x2x8x128xf32>
    %49 = arith.mulf %47, %48 : vector<2x2x8x128xf32>
    %50 = vector.shape_cast %49 : vector<2x2x8x128xf32> to vector<32x128xf32>
    %cst_13 = arith.constant dense<0.000000e+00> : vector<32x8xf32>
    %51 = tpu.matmul %50, %14, %cst_13 {dimension_numbers = #tpu.dot_dimension_numbers<[1], [0], [0], [1], [0, 0, 1, 1], [], []>} : vector<32x128xf32>, vector<128x8xf32>, vector<32x8xf32> -> vector<32x8xf32>
    %52 = vector.shape_cast %51 : vector<32x8xf32> to vector<2x2x8x8xf32>
    %cst_14 = arith.constant dense<0xFF800000> : vector<2x8x8xf32>
    %53 = vector.multi_reduction <maximumf>, %52, %cst_14 [1] : vector<2x2x8x8xf32> to vector<2x8x8xf32>
    %54 = vector.shape_cast %53 : vector<2x8x8xf32> to vector<2x1x8x8xf32>
    %55 = vector.broadcast %54 : vector<2x1x8x8xf32> to vector<2x2x8x8xf32>
    %56 = arith.subf %52, %55 : vector<2x2x8x8xf32>
    %57 = math.exp %56 : vector<2x2x8x8xf32>
    %cst_15 = arith.constant dense<0.000000e+00> : vector<2x8x8xf32>
    %58 = vector.multi_reduction <add>, %57, %cst_15 [1] : vector<2x2x8x8xf32> to vector<2x8x8xf32>
    %59 = vector.shape_cast %58 : vector<2x8x8xf32> to vector<2x1x8x8xf32>
    %60 = tpu.reciprocal %59 {approx = true} : vector<2x1x8x8xf32> -> vector<2x1x8x8xf32>
    %61 = vector.broadcast %60 : vector<2x1x8x8xf32> to vector<2x2x8x8xf32>
    %62 = arith.mulf %57, %61 : vector<2x2x8x8xf32>
    %63 = vector.shape_cast %62 : vector<2x2x8x8xf32> to vector<32x8xf32>
    %cst_16 = arith.constant dense<0.000000e+00> : vector<32x128xf32>
    %64 = tpu.matmul %63, %27, %cst_16 {dimension_numbers = #tpu.dot_dimension_numbers<[1], [0], [0], [1], [0, 0, 1, 1], [], []>} : vector<32x8xf32>, vector<8x128xf32>, vector<32x128xf32> -> vector<32x128xf32>
    %65 = vector.shape_cast %64 : vector<32x128xf32> to vector<2x2x8x128xf32>
    %66 = vector.shape_cast %44 : vector<2x8x128xf32> to vector<1x2x8x128xf32>
    %67 = vector.broadcast %66 : vector<1x2x8x128xf32> to vector<2x2x8x128xf32>
    %68 = arith.mulf %65, %67 : vector<2x2x8x128xf32>
    %cst_17 = arith.constant dense<0.000000e+00> : vector<2x8x128xf32>
    %69 = vector.multi_reduction <add>, %68, %cst_17 [1] : vector<2x2x8x128xf32> to vector<2x8x128xf32>
    %70 = vector.shape_cast %69 : vector<2x8x128xf32> to vector<16x128xf32>
    %c0_18 = arith.constant 0 : index
    %c0_19 = arith.constant 0 : index
    %c0_20 = arith.constant 0 : index
    %71 = vector.load %arg6[%c0_18, %c0_19, %c0_20] : memref<1x128x128xf32, #tpu.memory_space<vmem>>, vector<1x128x128xf32>
    %72 = vector.shape_cast %71 : vector<1x128x128xf32> to vector<128x128xf32>
    %cst_21 = arith.constant dense<0.000000e+00> : vector<16x128xf32>
    %73 = tpu.matmul %70, %72, %cst_21 {dimension_numbers = #tpu.dot_dimension_numbers<[1], [0], [0], [1], [0, 0, 1, 1], [], []>} : vector<16x128xf32>, vector<128x128xf32>, vector<16x128xf32> -> vector<16x128xf32>
    %c0_22 = arith.constant 0 : index
    %c0_23 = arith.constant 0 : index
    %c0_24 = arith.constant 0 : index
    %74 = vector.load %arg7[%c0_22, %c0_23, %c0_24] : memref<1x1x128xf32, #tpu.memory_space<vmem>>, vector<1x1x128xf32>
    %75 = vector.shape_cast %74 : vector<1x1x128xf32> to vector<1x128xf32>
    %76 = vector.broadcast %75 : vector<1x128xf32> to vector<16x128xf32>
    %77 = arith.addf %73, %76 : vector<16x128xf32>
    %78 = arith.addf %31, %77 : vector<16x128xf32>
    %c0_25 = arith.constant 0 : index
    %c0_26 = arith.constant 0 : index
    %c0_27 = arith.constant 0 : index
    %79 = vector.load %arg8[%c0_25, %c0_26, %c0_27] : memref<1x1x128xf32, #tpu.memory_space<vmem>>, vector<1x1x128xf32>
    %80 = vector.shape_cast %79 : vector<1x1x128xf32> to vector<1x128xf32>
    %c0_28 = arith.constant 0 : index
    %c0_29 = arith.constant 0 : index
    %c0_30 = arith.constant 0 : index
    %81 = vector.load %arg9[%c0_28, %c0_29, %c0_30] : memref<1x1x128xf32, #tpu.memory_space<vmem>>, vector<1x1x128xf32>
    %82 = vector.shape_cast %81 : vector<1x1x128xf32> to vector<1x128xf32>
    %cst_31 = arith.constant dense<0.000000e+00> : vector<16xf32>
    %83 = vector.multi_reduction <add>, %78, %cst_31 [1] : vector<16x128xf32> to vector<16xf32>
    %84 = vector.shape_cast %83 : vector<16xf32> to vector<16x1xf32>
    %cst_32 = arith.constant 1.280000e+02 : f32
    %85 = vector.broadcast %cst_32 : f32 to vector<16x1xf32>
    %86 = arith.divf %84, %85 : vector<16x1xf32>
    %87 = arith.mulf %78, %78 : vector<16x128xf32>
    %cst_33 = arith.constant dense<0.000000e+00> : vector<16xf32>
    %88 = vector.multi_reduction <add>, %87, %cst_33 [1] : vector<16x128xf32> to vector<16xf32>
    %89 = vector.shape_cast %88 : vector<16xf32> to vector<16x1xf32>
    %cst_34 = arith.constant 1.280000e+02 : f32
    %90 = vector.broadcast %cst_34 : f32 to vector<16x1xf32>
    %91 = arith.divf %89, %90 : vector<16x1xf32>
    %92 = arith.mulf %86, %86 : vector<16x1xf32>
    %93 = arith.subf %91, %92 : vector<16x1xf32>
    %94 = vector.broadcast %86 : vector<16x1xf32> to vector<16x128xf32>
    %95 = arith.subf %78, %94 : vector<16x128xf32>
    %cst_35 = arith.constant 9.99999974E-6 : f32
    %96 = vector.broadcast %cst_35 : f32 to vector<16x1xf32>
    %97 = arith.addf %93, %96 : vector<16x1xf32>
    %98 = math.rsqrt %97 : vector<16x1xf32>
    %99 = vector.broadcast %98 : vector<16x1xf32> to vector<16x128xf32>
    %100 = arith.mulf %95, %99 : vector<16x128xf32>
    %101 = vector.broadcast %80 : vector<1x128xf32> to vector<16x128xf32>
    %102 = arith.mulf %100, %101 : vector<16x128xf32>
    %103 = vector.broadcast %82 : vector<1x128xf32> to vector<16x128xf32>
    %104 = arith.addf %102, %103 : vector<16x128xf32>
    %c0_36 = arith.constant 0 : index
    %c0_37 = arith.constant 0 : index
    %c0_38 = arith.constant 0 : index
    %105 = vector.load %arg10[%c0_36, %c0_37, %c0_38] : memref<1x128x512xf32, #tpu.memory_space<vmem>>, vector<1x128x512xf32>
    %106 = vector.shape_cast %105 : vector<1x128x512xf32> to vector<128x512xf32>
    %cst_39 = arith.constant dense<0.000000e+00> : vector<16x512xf32>
    %107 = tpu.matmul %104, %106, %cst_39 {dimension_numbers = #tpu.dot_dimension_numbers<[1], [0], [0], [1], [0, 0, 1, 1], [], []>} : vector<16x128xf32>, vector<128x512xf32>, vector<16x512xf32> -> vector<16x512xf32>
    %c0_40 = arith.constant 0 : index
    %c0_41 = arith.constant 0 : index
    %c0_42 = arith.constant 0 : index
    %108 = vector.load %arg11[%c0_40, %c0_41, %c0_42] : memref<1x1x512xf32, #tpu.memory_space<vmem>>, vector<1x1x512xf32>
    %109 = vector.shape_cast %108 : vector<1x1x512xf32> to vector<1x512xf32>
    %110 = vector.broadcast %109 : vector<1x512xf32> to vector<16x512xf32>
    %111 = arith.addf %107, %110 : vector<16x512xf32>
    %cst_43 = arith.constant 0.000000e+00 : f32
    %112 = vector.broadcast %cst_43 : f32 to vector<16x512xf32>
    %113 = arith.maximumf %111, %112 : vector<16x512xf32>
    %c0_44 = arith.constant 0 : index
    %c0_45 = arith.constant 0 : index
    %c0_46 = arith.constant 0 : index
    %114 = vector.load %arg12[%c0_44, %c0_45, %c0_46] : memref<1x512x128xf32, #tpu.memory_space<vmem>>, vector<1x512x128xf32>
    %115 = vector.shape_cast %114 : vector<1x512x128xf32> to vector<512x128xf32>
    %cst_47 = arith.constant dense<0.000000e+00> : vector<16x128xf32>
    %116 = tpu.matmul %113, %115, %cst_47 {dimension_numbers = #tpu.dot_dimension_numbers<[1], [0], [0], [1], [0, 0, 1, 1], [], []>} : vector<16x512xf32>, vector<512x128xf32>, vector<16x128xf32> -> vector<16x128xf32>
    %c0_48 = arith.constant 0 : index
    %c0_49 = arith.constant 0 : index
    %c0_50 = arith.constant 0 : index
    %117 = vector.load %arg13[%c0_48, %c0_49, %c0_50] : memref<1x1x128xf32, #tpu.memory_space<vmem>>, vector<1x1x128xf32>
    %118 = vector.shape_cast %117 : vector<1x1x128xf32> to vector<1x128xf32>
    %119 = vector.broadcast %118 : vector<1x128xf32> to vector<16x128xf32>
    %120 = arith.addf %116, %119 : vector<16x128xf32>
    %121 = arith.addf %104, %120 : vector<16x128xf32>
    %c0_51 = arith.constant 0 : index
    %c0_52 = arith.constant 0 : index
    %c0_53 = arith.constant 0 : index
    %122 = vector.load %arg14[%c0_51, %c0_52, %c0_53] : memref<1x1x128xf32, #tpu.memory_space<vmem>>, vector<1x1x128xf32>
    %123 = vector.shape_cast %122 : vector<1x1x128xf32> to vector<1x128xf32>
    %c0_54 = arith.constant 0 : index
    %c0_55 = arith.constant 0 : index
    %c0_56 = arith.constant 0 : index
    %124 = vector.load %arg15[%c0_54, %c0_55, %c0_56] : memref<1x1x128xf32, #tpu.memory_space<vmem>>, vector<1x1x128xf32>
    %125 = vector.shape_cast %124 : vector<1x1x128xf32> to vector<1x128xf32>
    %cst_57 = arith.constant dense<0.000000e+00> : vector<16xf32>
    %126 = vector.multi_reduction <add>, %121, %cst_57 [1] : vector<16x128xf32> to vector<16xf32>
    %127 = vector.shape_cast %126 : vector<16xf32> to vector<16x1xf32>
    %cst_58 = arith.constant 1.280000e+02 : f32
    %128 = vector.broadcast %cst_58 : f32 to vector<16x1xf32>
    %129 = arith.divf %127, %128 : vector<16x1xf32>
    %130 = arith.mulf %121, %121 : vector<16x128xf32>
    %cst_59 = arith.constant dense<0.000000e+00> : vector<16xf32>
    %131 = vector.multi_reduction <add>, %130, %cst_59 [1] : vector<16x128xf32> to vector<16xf32>
    %132 = vector.shape_cast %131 : vector<16xf32> to vector<16x1xf32>
    %cst_60 = arith.constant 1.280000e+02 : f32
    %133 = vector.broadcast %cst_60 : f32 to vector<16x1xf32>
    %134 = arith.divf %132, %133 : vector<16x1xf32>
    %135 = arith.mulf %129, %129 : vector<16x1xf32>
    %136 = arith.subf %134, %135 : vector<16x1xf32>
    %137 = vector.broadcast %129 : vector<16x1xf32> to vector<16x128xf32>
    %138 = arith.subf %121, %137 : vector<16x128xf32>
    %cst_61 = arith.constant 9.99999974E-6 : f32
    %139 = vector.broadcast %cst_61 : f32 to vector<16x1xf32>
    %140 = arith.addf %136, %139 : vector<16x1xf32>
    %141 = math.rsqrt %140 : vector<16x1xf32>
    %142 = vector.broadcast %141 : vector<16x1xf32> to vector<16x128xf32>
    %143 = arith.mulf %138, %142 : vector<16x128xf32>
    %144 = vector.broadcast %123 : vector<1x128xf32> to vector<16x128xf32>
    %145 = arith.mulf %143, %144 : vector<16x128xf32>
    %146 = vector.broadcast %125 : vector<1x128xf32> to vector<16x128xf32>
    %147 = arith.addf %145, %146 : vector<16x128xf32>
    %c0_62 = arith.constant 0 : index
    %c0_63 = arith.constant 0 : index
    %148 = vector.load %arg19[%c0_62, %c0_63] : memref<16x128xf32, #tpu.memory_space<vmem>>, vector<16x128xf32>
    tpu.vector_store %arg19[%c0_62, %c0_63], %147 {strides = array<i32>} : memref<16x128xf32, #tpu.memory_space<vmem>>, vector<16x128xf32>,
    %c2_i32 = arith.constant 2 : i32
    %149 = arith.cmpi eq, %arg0, %c2_i32 : i32
    %150 = arith.extui %149 : i1 to i32
    %c0_i32_64 = arith.constant 0 : i32
    %151 = arith.cmpi ne, %150, %c0_i32_64 : i32
    scf.if %151 {
      %c0_65 = arith.constant 0 : index
      %c0_66 = arith.constant 0 : index
      %152 = vector.load %arg16[%c0_65, %c0_66] : memref<128x128xf32, #tpu.memory_space<vmem>>, vector<128x128xf32>
      %cst_67 = arith.constant dense<0.000000e+00> : vector<16x128xf32>
      %153 = tpu.matmul %147, %152, %cst_67 {dimension_numbers = #tpu.dot_dimension_numbers<[1], [0], [0], [1], [0, 0, 1, 1], [], []>} : vector<16x128xf32>, vector<128x128xf32>, vector<16x128xf32> -> vector<16x128xf32>
      %c0_68 = arith.constant 0 : index
      %c0_69 = arith.constant 0 : index
      %154 = vector.load %arg17[%c0_68, %c0_69] : memref<1x128xf32, #tpu.memory_space<vmem>>, vector<1x128xf32>
      %155 = vector.broadcast %154 : vector<1x128xf32> to vector<16x128xf32>
      %156 = arith.addf %153, %155 : vector<16x128xf32>
      %c0_70 = arith.constant 0 : index
      %c0_71 = arith.constant 0 : index
      %157 = vector.load %arg18[%c0_70, %c0_71] : memref<16x128xf32, #tpu.memory_space<vmem>>, vector<16x128xf32>
      tpu.vector_store %arg18[%c0_70, %c0_71], %156 {strides = array<i32>} : memref<16x128xf32, #tpu.memory_space<vmem>>, vector<16x128xf32>,
    } else {
    }
    return
  }
  func.func @transform_0(%arg0: i32) -> (i32, i32) {
    %c0_i32 = arith.constant 0 : i32
    %c0_i32_0 = arith.constant 0 : i32
    %c0_i32_1 = arith.constant 0 : i32
    return %c0_i32, %c0_i32_0 : i32, i32
  }
  func.func @transform_1(%arg0: i32) -> (i32, i32) {
    %c0_i32 = arith.constant 0 : i32
    %c0_i32_0 = arith.constant 0 : i32
    %c0_i32_1 = arith.constant 0 : i32
    return %c0_i32, %c0_i32_0 : i32, i32
  }
  func.func @transform_2(%arg0: i32) -> (i32, i32) {
    %c0_i32 = arith.constant 0 : i32
    %c0_i32_0 = arith.constant 0 : i32
    %c0_i32_1 = arith.constant 0 : i32
    return %c0_i32, %c0_i32_0 : i32, i32
  }
  func.func @transform_3(%arg0: i32) -> (i32, i32, i32) {
    %c0_i32 = arith.constant 0 : i32
    %c0_i32_0 = arith.constant 0 : i32
    %c0_i32_1 = arith.constant 0 : i32
    return %arg0, %c0_i32, %c0_i32_0 : i32, i32, i32
  }
  func.func @transform_4(%arg0: i32) -> (i32, i32, i32) {
    %c0_i32 = arith.constant 0 : i32
    %c0_i32_0 = arith.constant 0 : i32
    %c0_i32_1 = arith.constant 0 : i32
    return %arg0, %c0_i32, %c0_i32_0 : i32, i32, i32
  }
  func.func @transform_5(%arg0: i32) -> (i32, i32, i32) {
    %c0_i32 = arith.constant 0 : i32
    %c0_i32_0 = arith.constant 0 : i32
    %c0_i32_1 = arith.constant 0 : i32
    return %arg0, %c0_i32, %c0_i32_0 : i32, i32, i32
  }
  func.func @transform_6(%arg0: i32) -> (i32, i32, i32) {
    %c0_i32 = arith.constant 0 : i32
    %c0_i32_0 = arith.constant 0 : i32
    %c0_i32_1 = arith.constant 0 : i32
    return %arg0, %c0_i32, %c0_i32_0 : i32, i32, i32
  }
  func.func @transform_7(%arg0: i32) -> (i32, i32, i32) {
    %c0_i32 = arith.constant 0 : i32
    %c0_i32_0 = arith.constant 0 : i32
    %c0_i32_1 = arith.constant 0 : i32
    return %arg0, %c0_i32, %c0_i32_0 : i32, i32, i32
  }
  func.func @transform_8(%arg0: i32) -> (i32, i32, i32) {
    %c0_i32 = arith.constant 0 : i32
    %c0_i32_0 = arith.constant 0 : i32
    %c0_i32_1 = arith.constant 0 : i32
    return %arg0, %c0_i32, %c0_i32_0 : i32, i32, i32
  }
  func.func @transform_9(%arg0: i32) -> (i32, i32, i32) {
    %c0_i32 = arith.constant 0 : i32
    %c0_i32_0 = arith.constant 0 : i32
    %c0_i32_1 = arith.constant 0 : i32
    return %arg0, %c0_i32, %c0_i32_0 : i32, i32, i32
  }
  func.func @transform_10(%arg0: i32) -> (i32, i32, i32) {
    %c0_i32 = arith.constant 0 : i32
    %c0_i32_0 = arith.constant 0 : i32
    %c0_i32_1 = arith.constant 0 : i32
    return %arg0, %c0_i32, %c0_i32_0 : i32, i32, i32
  }
  func.func @transform_11(%arg0: i32) -> (i32, i32, i32) {
    %c0_i32 = arith.constant 0 : i32
    %c0_i32_0 = arith.constant 0 : i32
    %c0_i32_1 = arith.constant 0 : i32
    return %arg0, %c0_i32, %c0_i32_0 : i32, i32, i32
  }
  func.func @transform_12(%arg0: i32) -> (i32, i32, i32) {
    %c0_i32 = arith.constant 0 : i32
    %c0_i32_0 = arith.constant 0 : i32
    %c0_i32_1 = arith.constant 0 : i32
    return %arg0, %c0_i32, %c0_i32_0 : i32, i32, i32
  }
  func.func @transform_13(%arg0: i32) -> (i32, i32, i32) {
    %c0_i32 = arith.constant 0 : i32
    %c0_i32_0 = arith.constant 0 : i32
    %c0_i32_1 = arith.constant 0 : i32
    return %arg0, %c0_i32, %c0_i32_0 : i32, i32, i32
  }
  func.func @transform_14(%arg0: i32) -> (i32, i32, i32) {
    %c0_i32 = arith.constant 0 : i32
    %c0_i32_0 = arith.constant 0 : i32
    %c0_i32_1 = arith.constant 0 : i32
    return %arg0, %c0_i32, %c0_i32_0 : i32, i32, i32
  }
  func.func @transform_15(%arg0: i32) -> (i32, i32) {
    %c0_i32 = arith.constant 0 : i32
    %c0_i32_0 = arith.constant 0 : i32
    %c0_i32_1 = arith.constant 0 : i32
    return %c0_i32, %c0_i32_0 : i32, i32
  }
  func.func @transform_16(%arg0: i32) -> (i32, i32) {
    %c0_i32 = arith.constant 0 : i32
    %c0_i32_0 = arith.constant 0 : i32
    %c0_i32_1 = arith.constant 0 : i32
    return %c0_i32, %c0_i32_0 : i32, i32
  }
  func.func @transform_17(%arg0: i32) -> (i32, i32) {
    %c0_i32 = arith.constant 0 : i32
    %c0_i32_0 = arith.constant 0 : i32
    %c0_i32_1 = arith.constant 0 : i32
    return %c0_i32, %c0_i32_0 : i32, i32
  }
}

</mosaic_0001>

<llo_original>
// kernel: tpu_custom_call.1
$region0: #{tpu_custom_call.1}
  #allocation0 [shape = 'u32[]', space=smem, size = 0x4, offset = 0x4, fixed_abs, tag = 'smem constant byte address 0x4 - core index']
  #allocation1 [shape = 'u32[144,128]{1,0:T(1,128)}', space=vmem, size = 0x12000, scoped, tag = 'internal scratch']
  #allocation2 [shape = 'f32[16,128]{1,0:T(8,128)}', space=vmem, size = 0x2000, scoped, tag = 'scratch operand']
  %s0 = inlined_call_operand.vmem [shape: s32[16,1], index: 0, kind: input, shape index: {}]
  %s1 = inlined_call_operand.vmem [shape: f32[16,128], index: 1, kind: input, shape index: {}]
  %s2 = inlined_call_operand.hbm [shape: f32[128,128], index: 2, kind: input, shape index: {}]
  %s3 = inlined_call_operand.hbm [shape: f32[3,128,384], index: 3, kind: input, shape index: {}]
  %s4 = inlined_call_operand.hbm [shape: f32[3,1,384], index: 4, kind: input, shape index: {}]
  %s5 = inlined_call_operand.hbm [shape: f32[3,128,128], index: 5, kind: input, shape index: {}]
  %s6 = inlined_call_operand.vmem [shape: f32[3,1,128], index: 6, kind: input, shape index: {}]
  %s7 = inlined_call_operand.vmem [shape: f32[3,1,128], index: 7, kind: input, shape index: {}]
  %s8 = inlined_call_operand.vmem [shape: f32[3,1,128], index: 8, kind: input, shape index: {}]
  %s9 = inlined_call_operand.hbm [shape: f32[3,128,512], index: 9, kind: input, shape index: {}]
  %s10 = inlined_call_operand.vmem [shape: f32[3,1,512], index: 10, kind: input, shape index: {}]
  %s11 = inlined_call_operand.hbm [shape: f32[3,512,128], index: 11, kind: input, shape index: {}]
  %s12 = inlined_call_operand.vmem [shape: f32[3,1,128], index: 12, kind: input, shape index: {}]
  %s13 = inlined_call_operand.vmem [shape: f32[3,1,128], index: 13, kind: input, shape index: {}]
  %s14 = inlined_call_operand.vmem [shape: f32[3,1,128], index: 14, kind: input, shape index: {}]
  %s15 = inlined_call_operand.hbm [shape: f32[128,128], index: 15, kind: input, shape index: {}]
  %s16 = inlined_call_operand.vmem [shape: f32[1,128], index: 16, kind: input, shape index: {}]
  %s17 = inlined_call_operand.hbm [shape: f32[16,128], index: 17, kind: output, shape index: {}]
  %s18 = sld [smem:[#allocation0]]
  $region137: #{tpu_custom_call.1} parent=0
    _
  %s20 = ssub.s32 1, %s18
  %s21 = scalar_select 0, %s20, %s18
  $region1: #{tpu_custom_call.1} parent=0
    #allocation3 [shape = 'u8[65536]{0}', space=vmem, size = 0x10000, scoped, tag = 'input window, operand 2, single buffered']
    #allocation4 [shape = 's32[2]{0}', space=sflag, size = 0x8, scoped, tag = 'scoped memory for tpu_custom_call.1']
    #allocation5 [shape = 's32[2]{0}', space=sflag, size = 0x8, scoped, tag = 'scoped memory for tpu_custom_call.1']
    #allocation6 [shape = 'u8[393216]{0}', space=vmem, size = 0x60000, scoped, tag = 'input window, operand 3']
    #allocation7 [shape = 's32[2]{0}', space=sflag, size = 0x8, scoped, tag = 'scoped memory for tpu_custom_call.1']
    #allocation8 [shape = 'u8[3072]{0}', space=vmem, size = 0xc00, scoped, tag = 'input window, operand 4']
    #allocation9 [shape = 'u8[131072]{0}', space=vmem, size = 0x20000, scoped, tag = 'input window, operand 5']
    #allocation10 [shape = 's32[2]{0}', space=sflag, size = 0x8, scoped, tag = 'scoped memory for tpu_custom_call.1']
    #allocation11 [shape = 'u8[524288]{0}', space=vmem, size = 0x80000, scoped, tag = 'input window, operand 9']
    #allocation12 [shape = 'u8[524288]{0}', space=vmem, size = 0x80000, scoped, tag = 'input window, operand 11']
    #allocation13 [shape = 's32[2]{0}', space=sflag, size = 0x8, scoped, tag = 'scoped memory for tpu_custom_call.1']
    #allocation14 [shape = 'u8[65536]{0}', space=vmem, size = 0x10000, scoped, tag = 'input window, operand 15, single buffered']
    #allocation15 [shape = 'u8[8192]{0}', space=vmem, size = 0x2000, scoped, tag = 'output window, operand 0, single buffered']
    %22 = vsyncpa [#allocation4], 0
    %23 = vsyncpa [#allocation7], 0
    %s24 = scalar_lea.sflag [#allocation7], 1
    %25 = vsyncpa %s24, 0
    %26 = vsyncpa [#allocation10], 0
    %s27 = scalar_lea.sflag [#allocation10], 1
    %28 = vsyncpa %s27, 0
    %29 = vsyncpa [#allocation13], 0
    %s30 = scalar_lea.sflag [#allocation13], 1
    %31 = vsyncpa %s30, 0
    %32 = vsyncpa [#allocation5], 0
    loop: start=0, step=1, limit=5
    $region2: #{tpu_custom_call.1} parent=1 // loop_pre_header
      _
    $region3: #{tpu_custom_call.1} parent=1 // loop_header
      %s34 = sphi 0, %s38
      %p35 = scmp.ge.s32.totalorder %s34, 5
      %s42 = sphi 0, %s42
      %s44 = sphi 0, %s42
      %s45 = sphi 0, %s44
      %s59 = sphi 0, %s45
      %s63 = sphi 0, %s63
      %s65 = sphi 0, %s63
      %s66 = sphi 0, %s65
      %s80 = sphi 0, %s66
      %s84 = sphi 0, %s84
      %s86 = sphi 0, %s84
      %s87 = sphi 0, %s86
      %s101 = sphi 0, %s87
      %s107 = sphi 0, %s109
      %s110 = sphi 0, %s107
      %s111 = sphi 0, %s110
      %s127 = sphi 0, %s111
      %s133 = sphi 0, %s135
      %s136 = sphi 0, %s133
      %s137 = sphi 0, %s136
      %s153 = sphi 0, %s137
      %s159 = sphi 0, %s161
      %s162 = sphi 0, %s159
      %s163 = sphi 0, %s162
      %s179 = sphi 0, %s163
      %s185 = sphi 0, %s187
      %s188 = sphi 0, %s185
      %s189 = sphi 0, %s188
      %s205 = sphi 0, %s189
      %s211 = sphi 0, %s213
      %s214 = sphi 0, %s211
      %s215 = sphi 0, %s214
      %s231 = sphi 0, %s215
      %s237 = sphi 0, %s239
      %s240 = sphi 0, %s237
      %s241 = sphi 0, %s240
      %s257 = sphi 0, %s241
      %s263 = sphi 0, %s265
      %s266 = sphi 0, %s263
      %s267 = sphi 0, %s266
      %s283 = sphi 0, %s267
      %s289 = sphi 0, %s291
      %s292 = sphi 0, %s289
      %s293 = sphi 0, %s292
      %s309 = sphi 0, %s293
      %s315 = sphi 0, %s317
      %s318 = sphi 0, %s315
      %s319 = sphi 0, %s318
      %s335 = sphi 0, %s319
      %s341 = sphi 0, %s343
      %s344 = sphi 0, %s341
      %s345 = sphi 0, %s344
      %s361 = sphi 0, %s345
      %s367 = sphi 0, %s369
      %s370 = sphi 0, %s367
      %s371 = sphi 0, %s370
      %s387 = sphi 0, %s371
      %s393 = sphi 0, %s395
      %s396 = sphi 0, %s393
      %s397 = sphi 0, %s396
      %s413 = sphi 0, %s397
      %s417 = sphi 0, %s417
      %s419 = sphi 0, %s417
      %s420 = sphi 0, %s419
      %s434 = sphi 0, %s420
      %s438 = sphi 0, %s438
      %s440 = sphi 0, %s438
      %s441 = sphi 0, %s440
      %s455 = sphi 0, %s441
      %s459 = sphi 0, %s459
      %s461 = sphi 0, %s459
      %s462 = sphi 0, %s461
      %s476 = sphi 0, %s462
    $region4: #{tpu_custom_call.1} parent=1 // loop_header_branch
      %37 = sbr.rel (%p35) target = $region8
    $region5: #{tpu_custom_call.1} parent=1 // loop_body
      %s39 = ssub.s32 %s34, 1
      %s40 = ssub.s32 %s34, 2
      %s41 = sadd.s32 %s34, 1
      %s43 = sadd.s32 %s42, 1
      %p46 = scmp.eq.s32.totalorder %s34, 2
      %p47 = scmp.ne.s32.totalorder %s42, %s44
      %p48 = scmp.eq.s32.totalorder %s34, 0
      %p49 = por %p47, %p48
      %p50 = scmp.ne.s32.totalorder %s42, %s44
      %p51 = scmp.eq.s32.totalorder %s39, 2
      %p52 = por %p50, %p51
      %p53 = scmp.ne.s32.totalorder %s44, %s45
      %p54 = scmp.eq.s32.totalorder %s39, 0
      %p55 = por %p53, %p54
      %p56 = scmp.ne.s32.totalorder %s44, %s45
      %p57 = scmp.eq.s32.totalorder %s40, 2
      %p58 = por %p56, %p57
      %p60 = scmp.ne.s32.totalorder %s45, %s59
      %p61 = scmp.eq.s32.totalorder %s40, 0
      %p62 = por %p60, %p61
      %s64 = sadd.s32 %s63, 1
      %p67 = scmp.eq.s32.totalorder %s34, 2
      %p68 = scmp.ne.s32.totalorder %s63, %s65
      %p69 = scmp.eq.s32.totalorder %s34, 0
      %p70 = por %p68, %p69
      %p71 = scmp.ne.s32.totalorder %s63, %s65
      %p72 = scmp.eq.s32.totalorder %s39, 2
      %p73 = por %p71, %p72
      %p74 = scmp.ne.s32.totalorder %s65, %s66
      %p75 = scmp.eq.s32.totalorder %s39, 0
      %p76 = por %p74, %p75
      %p77 = scmp.ne.s32.totalorder %s65, %s66
      %p78 = scmp.eq.s32.totalorder %s40, 2
      %p79 = por %p77, %p78
      %p81 = scmp.ne.s32.totalorder %s66, %s80
      %p82 = scmp.eq.s32.totalorder %s40, 0
      %p83 = por %p81, %p82
      %s85 = sadd.s32 %s84, 1
      %p88 = scmp.eq.s32.totalorder %s34, 2
      %p89 = scmp.ne.s32.totalorder %s84, %s86
      %p90 = scmp.eq.s32.totalorder %s34, 0
      %p91 = por %p89, %p90
      %p92 = scmp.ne.s32.totalorder %s84, %s86
      %p93 = scmp.eq.s32.totalorder %s39, 2
      %p94 = por %p92, %p93
      %p95 = scmp.ne.s32.totalorder %s86, %s87
      %p96 = scmp.eq.s32.totalorder %s39, 0
      %p97 = por %p95, %p96
      %p98 = scmp.ne.s32.totalorder %s86, %s87
      %p99 = scmp.eq.s32.totalorder %s40, 2
      %p100 = por %p98, %p99
      %p102 = scmp.ne.s32.totalorder %s87, %s101
      %p103 = scmp.eq.s32.totalorder %s40, 0
      %p104 = por %p102, %p103
      %s105 = ssub.s32 %s34, %s41
      %p106 = scmp.eq.s32.totalorder %s105, 0
      %s108 = sadd.s32 %s107, 1
      %s109 = scalar_select %p106, %s107, %s108
      %p112 = pneg %p106
      %p113 = scmp.eq.s32.totalorder %s34, 2
      %p114 = por %p112, %p113
      %p115 = scmp.ne.s32.totalorder %s107, %s110
      %p116 = scmp.eq.s32.totalorder %s34, 0
      %p117 = por %p115, %p116
      %p118 = scmp.ne.s32.totalorder %s107, %s110
      %p119 = scmp.eq.s32.totalorder %s39, 2
      %p120 = por %p118, %p119
      %p121 = scmp.ne.s32.totalorder %s110, %s111
      %p122 = scmp.eq.s32.totalorder %s39, 0
      %p123 = por %p121, %p122
      %p124 = scmp.ne.s32.totalorder %s110, %s111
      %p125 = scmp.eq.s32.totalorder %s40, 2
      %p126 = por %p124, %p125
      %p128 = scmp.ne.s32.totalorder %s111, %s127
      %p129 = scmp.eq.s32.totalorder %s40, 0
      %p130 = por %p128, %p129
      %s131 = ssub.s32 %s34, %s41
      %p132 = scmp.eq.s32.totalorder %s131, 0
      %s134 = sadd.s32 %s133, 1
      %s135 = scalar_select %p132, %s133, %s134
      %p138 = pneg %p132
      %p139 = scmp.eq.s32.totalorder %s34, 2
      %p140 = por %p138, %p139
      %p141 = scmp.ne.s32.totalorder %s133, %s136
      %p142 = scmp.eq.s32.totalorder %s34, 0
      %p143 = por %p141, %p142
      %p144 = scmp.ne.s32.totalorder %s133, %s136
      %p145 = scmp.eq.s32.totalorder %s39, 2
      %p146 = por %p144, %p145
      %p147 = scmp.ne.s32.totalorder %s136, %s137
      %p148 = scmp.eq.s32.totalorder %s39, 0
      %p149 = por %p147, %p148
      %p150 = scmp.ne.s32.totalorder %s136, %s137
      %p151 = scmp.eq.s32.totalorder %s40, 2
      %p152 = por %p150, %p151
      %p154 = scmp.ne.s32.totalorder %s137, %s153
      %p155 = scmp.eq.s32.totalorder %s40, 0
      %p156 = por %p154, %p155
      %s157 = ssub.s32 %s34, %s41
      %p158 = scmp.eq.s32.totalorder %s157, 0
      %s160 = sadd.s32 %s159, 1
      %s161 = scalar_select %p158, %s159, %s160
      %p164 = pneg %p158
      %p165 = scmp.eq.s32.totalorder %s34, 2
      %p166 = por %p164, %p165
      %p167 = scmp.ne.s32.totalorder %s159, %s162
      %p168 = scmp.eq.s32.totalorder %s34, 0
      %p169 = por %p167, %p168
      %p170 = scmp.ne.s32.totalorder %s159, %s162
      %p171 = scmp.eq.s32.totalorder %s39, 2
      %p172 = por %p170, %p171
      %p173 = scmp.ne.s32.totalorder %s162, %s163
      %p174 = scmp.eq.s32.totalorder %s39, 0
      %p175 = por %p173, %p174
      %p176 = scmp.ne.s32.totalorder %s162, %s163
      %p177 = scmp.eq.s32.totalorder %s40, 2
      %p178 = por %p176, %p177
      %p180 = scmp.ne.s32.totalorder %s163, %s179
      %p181 = scmp.eq.s32.totalorder %s40, 0
      %p182 = por %p180, %p181
      %s183 = ssub.s32 %s34, %s41
      %p184 = scmp.eq.s32.totalorder %s183, 0
      %s186 = sadd.s32 %s185, 1
      %s187 = scalar_select %p184, %s185, %s186
      %p190 = pneg %p184
      %p191 = scmp.eq.s32.totalorder %s34, 2
      %p192 = por %p190, %p191
      %p193 = scmp.ne.s32.totalorder %s185, %s188
      %p194 = scmp.eq.s32.totalorder %s34, 0
      %p195 = por %p193, %p194
      %p196 = scmp.ne.s32.totalorder %s185, %s188
      %p197 = scmp.eq.s32.totalorder %s39, 2
      %p198 = por %p196, %p197
      %p199 = scmp.ne.s32.totalorder %s188, %s189
      %p200 = scmp.eq.s32.totalorder %s39, 0
      %p201 = por %p199, %p200
      %p202 = scmp.ne.s32.totalorder %s188, %s189
      %p203 = scmp.eq.s32.totalorder %s40, 2
      %p204 = por %p202, %p203
      %p206 = scmp.ne.s32.totalorder %s189, %s205
      %p207 = scmp.eq.s32.totalorder %s40, 0
      %p208 = por %p206, %p207
      %s209 = ssub.s32 %s34, %s41
      %p210 = scmp.eq.s32.totalorder %s209, 0
      %s212 = sadd.s32 %s211, 1
      %s213 = scalar_select %p210, %s211, %s212
      %p216 = pneg %p210
      %p217 = scmp.eq.s32.totalorder %s34, 2
      %p218 = por %p216, %p217
      %p219 = scmp.ne.s32.totalorder %s211, %s214
      %p220 = scmp.eq.s32.totalorder %s34, 0
      %p221 = por %p219, %p220
      %p222 = scmp.ne.s32.totalorder %s211, %s214
      %p223 = scmp.eq.s32.totalorder %s39, 2
      %p224 = por %p222, %p223
      %p225 = scmp.ne.s32.totalorder %s214, %s215
      %p226 = scmp.eq.s32.totalorder %s39, 0
      %p227 = por %p225, %p226
      %p228 = scmp.ne.s32.totalorder %s214, %s215
      %p229 = scmp.eq.s32.totalorder %s40, 2
      %p230 = por %p228, %p229
      %p232 = scmp.ne.s32.totalorder %s215, %s231
      %p233 = scmp.eq.s32.totalorder %s40, 0
      %p234 = por %p232, %p233
      %s235 = ssub.s32 %s34, %s41
      %p236 = scmp.eq.s32.totalorder %s235, 0
      %s238 = sadd.s32 %s237, 1
      %s239 = scalar_select %p236, %s237, %s238
      %p242 = pneg %p236
      %p243 = scmp.eq.s32.totalorder %s34, 2
      %p244 = por %p242, %p243
      %p245 = scmp.ne.s32.totalorder %s237, %s240
      %p246 = scmp.eq.s32.totalorder %s34, 0
      %p247 = por %p245, %p246
      %p248 = scmp.ne.s32.totalorder %s237, %s240
      %p249 = scmp.eq.s32.totalorder %s39, 2
      %p250 = por %p248, %p249
      %p251 = scmp.ne.s32.totalorder %s240, %s241
      %p252 = scmp.eq.s32.totalorder %s39, 0
      %p253 = por %p251, %p252
      %p254 = scmp.ne.s32.totalorder %s240, %s241
      %p255 = scmp.eq.s32.totalorder %s40, 2
      %p256 = por %p254, %p255
      %p258 = scmp.ne.s32.totalorder %s241, %s257
      %p259 = scmp.eq.s32.totalorder %s40, 0
      %p260 = por %p258, %p259
      %s261 = ssub.s32 %s34, %s41
      %p262 = scmp.eq.s32.totalorder %s261, 0
      %s264 = sadd.s32 %s263, 1
      %s265 = scalar_select %p262, %s263, %s264
      %p268 = pneg %p262
      %p269 = scmp.eq.s32.totalorder %s34, 2
      %p270 = por %p268, %p269
      %p271 = scmp.ne.s32.totalorder %s263, %s266
      %p272 = scmp.eq.s32.totalorder %s34, 0
      %p273 = por %p271, %p272
      %p274 = scmp.ne.s32.totalorder %s263, %s266
      %p275 = scmp.eq.s32.totalorder %s39, 2
      %p276 = por %p274, %p275
      %p277 = scmp.ne.s32.totalorder %s266, %s267
      %p278 = scmp.eq.s32.totalorder %s39, 0
      %p279 = por %p277, %p278
      %p280 = scmp.ne.s32.totalorder %s266, %s267
      %p281 = scmp.eq.s32.totalorder %s40, 2
      %p282 = por %p280, %p281
      %p284 = scmp.ne.s32.totalorder %s267, %s283
      %p285 = scmp.eq.s32.totalorder %s40, 0
      %p286 = por %p284, %p285
      %s287 = ssub.s32 %s34, %s41
      %p288 = scmp.eq.s32.totalorder %s287, 0
      %s290 = sadd.s32 %s289, 1
      %s291 = scalar_select %p288, %s289, %s290
      %p294 = pneg %p288
      %p295 = scmp.eq.s32.totalorder %s34, 2
      %p296 = por %p294, %p295
      %p297 = scmp.ne.s32.totalorder %s289, %s292
      %p298 = scmp.eq.s32.totalorder %s34, 0
      %p299 = por %p297, %p298
      %p300 = scmp.ne.s32.totalorder %s289, %s292
      %p301 = scmp.eq.s32.totalorder %s39, 2
      %p302 = por %p300, %p301
      %p303 = scmp.ne.s32.totalorder %s292, %s293
      %p304 = scmp.eq.s32.totalorder %s39, 0
      %p305 = por %p303, %p304
      %p306 = scmp.ne.s32.totalorder %s292, %s293
      %p307 = scmp.eq.s32.totalorder %s40, 2
      %p308 = por %p306, %p307
      %p310 = scmp.ne.s32.totalorder %s293, %s309
      %p311 = scmp.eq.s32.totalorder %s40, 0
      %p312 = por %p310, %p311
      %s313 = ssub.s32 %s34, %s41
      %p314 = scmp.eq.s32.totalorder %s313, 0
      %s316 = sadd.s32 %s315, 1
      %s317 = scalar_select %p314, %s315, %s316
      %p320 = pneg %p314
      %p321 = scmp.eq.s32.totalorder %s34, 2
      %p322 = por %p320, %p321
      %p323 = scmp.ne.s32.totalorder %s315, %s318
      %p324 = scmp.eq.s32.totalorder %s34, 0
      %p325 = por %p323, %p324
      %p326 = scmp.ne.s32.totalorder %s315, %s318
      %p327 = scmp.eq.s32.totalorder %s39, 2
      %p328 = por %p326, %p327
      %p329 = scmp.ne.s32.totalorder %s318, %s319
      %p330 = scmp.eq.s32.totalorder %s39, 0
      %p331 = por %p329, %p330
      %p332 = scmp.ne.s32.totalorder %s318, %s319
      %p333 = scmp.eq.s32.totalorder %s40, 2
      %p334 = por %p332, %p333
      %p336 = scmp.ne.s32.totalorder %s319, %s335
      %p337 = scmp.eq.s32.totalorder %s40, 0
      %p338 = por %p336, %p337
      %s339 = ssub.s32 %s34, %s41
      %p340 = scmp.eq.s32.totalorder %s339, 0
      %s342 = sadd.s32 %s341, 1
      %s343 = scalar_select %p340, %s341, %s342
      %p346 = pneg %p340
      %p347 = scmp.eq.s32.totalorder %s34, 2
      %p348 = por %p346, %p347
      %p349 = scmp.ne.s32.totalorder %s341, %s344
      %p350 = scmp.eq.s32.totalorder %s34, 0
      %p351 = por %p349, %p350
      %p352 = scmp.ne.s32.totalorder %s341, %s344
      %p353 = scmp.eq.s32.totalorder %s39, 2
      %p354 = por %p352, %p353
      %p355 = scmp.ne.s32.totalorder %s344, %s345
      %p356 = scmp.eq.s32.totalorder %s39, 0
      %p357 = por %p355, %p356
      %p358 = scmp.ne.s32.totalorder %s344, %s345
      %p359 = scmp.eq.s32.totalorder %s40, 2
      %p360 = por %p358, %p359
      %p362 = scmp.ne.s32.totalorder %s345, %s361
      %p363 = scmp.eq.s32.totalorder %s40, 0
      %p364 = por %p362, %p363
      %s365 = ssub.s32 %s34, %s41
      %p366 = scmp.eq.s32.totalorder %s365, 0
      %s368 = sadd.s32 %s367, 1
      %s369 = scalar_select %p366, %s367, %s368
      %p372 = pneg %p366
      %p373 = scmp.eq.s32.totalorder %s34, 2
      %p374 = por %p372, %p373
      %p375 = scmp.ne.s32.totalorder %s367, %s370
      %p376 = scmp.eq.s32.totalorder %s34, 0
      %p377 = por %p375, %p376
      %p378 = scmp.ne.s32.totalorder %s367, %s370
      %p379 = scmp.eq.s32.totalorder %s39, 2
      %p380 = por %p378, %p379
      %p381 = scmp.ne.s32.totalorder %s370, %s371
      %p382 = scmp.eq.s32.totalorder %s39, 0
      %p383 = por %p381, %p382
      %p384 = scmp.ne.s32.totalorder %s370, %s371
      %p385 = scmp.eq.s32.totalorder %s40, 2
      %p386 = por %p384, %p385
      %p388 = scmp.ne.s32.totalorder %s371, %s387
      %p389 = scmp.eq.s32.totalorder %s40, 0
      %p390 = por %p388, %p389
      %s391 = ssub.s32 %s34, %s41
      %p392 = scmp.eq.s32.totalorder %s391, 0
      %s394 = sadd.s32 %s393, 1
      %s395 = scalar_select %p392, %s393, %s394
      %p398 = pneg %p392
      %p399 = scmp.eq.s32.totalorder %s34, 2
      %p400 = por %p398, %p399
      %p401 = scmp.ne.s32.totalorder %s393, %s396
      %p402 = scmp.eq.s32.totalorder %s34, 0
      %p403 = por %p401, %p402
      %p404 = scmp.ne.s32.totalorder %s393, %s396
      %p405 = scmp.eq.s32.totalorder %s39, 2
      %p406 = por %p404, %p405
      %p407 = scmp.ne.s32.totalorder %s396, %s397
      %p408 = scmp.eq.s32.totalorder %s39, 0
      %p409 = por %p407, %p408
      %p410 = scmp.ne.s32.totalorder %s396, %s397
      %p411 = scmp.eq.s32.totalorder %s40, 2
      %p412 = por %p410, %p411
      %p414 = scmp.ne.s32.totalorder %s397, %s413
      %p415 = scmp.eq.s32.totalorder %s40, 0
      %p416 = por %p414, %p415
      %s418 = sadd.s32 %s417, 1
      %p421 = scmp.eq.s32.totalorder %s34, 2
      %p422 = scmp.ne.s32.totalorder %s417, %s419
      %p423 = scmp.eq.s32.totalorder %s34, 0
      %p424 = por %p422, %p423
      %p425 = scmp.ne.s32.totalorder %s417, %s419
      %p426 = scmp.eq.s32.totalorder %s39, 2
      %p427 = por %p425, %p426
      %p428 = scmp.ne.s32.totalorder %s419, %s420
      %p429 = scmp.eq.s32.totalorder %s39, 0
      %p430 = por %p428, %p429
      %p431 = scmp.ne.s32.totalorder %s419, %s420
      %p432 = scmp.eq.s32.totalorder %s40, 2
      %p433 = por %p431, %p432
      %p435 = scmp.ne.s32.totalorder %s420, %s434
      %p436 = scmp.eq.s32.totalorder %s40, 0
      %p437 = por %p435, %p436
      %s439 = sadd.s32 %s438, 1
      %p442 = scmp.eq.s32.totalorder %s34, 2
      %p443 = scmp.ne.s32.totalorder %s438, %s440
      %p444 = scmp.eq.s32.totalorder %s34, 0
      %p445 = por %p443, %p444
      %p446 = scmp.ne.s32.totalorder %s438, %s440
      %p447 = scmp.eq.s32.totalorder %s39, 2
      %p448 = por %p446, %p447
      %p449 = scmp.ne.s32.totalorder %s440, %s441
      %p450 = scmp.eq.s32.totalorder %s39, 0
      %p451 = por %p449, %p450
      %p452 = scmp.ne.s32.totalorder %s440, %s441
      %p453 = scmp.eq.s32.totalorder %s40, 2
      %p454 = por %p452, %p453
      %p456 = scmp.ne.s32.totalorder %s441, %s455
      %p457 = scmp.eq.s32.totalorder %s40, 0
      %p458 = por %p456, %p457
      %s460 = sadd.s32 %s459, 1
      %p463 = scmp.eq.s32.totalorder %s34, 2
      %p464 = scmp.ne.s32.totalorder %s459, %s461
      %p465 = scmp.eq.s32.totalorder %s34, 0
      %p466 = por %p464, %p465
      %p467 = scmp.ne.s32.totalorder %s459, %s461
      %p468 = scmp.eq.s32.totalorder %s39, 2
      %p469 = por %p467, %p468
      %p470 = scmp.ne.s32.totalorder %s461, %s462
      %p471 = scmp.eq.s32.totalorder %s39, 0
      %p472 = por %p470, %p471
      %p473 = scmp.ne.s32.totalorder %s461, %s462
      %p474 = scmp.eq.s32.totalorder %s40, 2
      %p475 = por %p473, %p474
      %p477 = scmp.ne.s32.totalorder %s462, %s476
      %p478 = scmp.eq.s32.totalorder %s40, 0
      %p479 = por %p477, %p478
      %p480 = scmp.le.s32.totalorder 1, %s34
      %p481 = scmp.lt.s32.totalorder %s34, 4
      %p482 = pnand %p480, %p481
      %p483 = pneg %p482
      // Predicated region
      $region9: #{tpu_custom_call.1} parent=5 // pred_check
        _
      $region10: #{tpu_custom_call.1} parent=5 // pred_check_branch
        %485 = sbr.rel (%p482) target = $region12
      $region11: #{tpu_custom_call.1} parent=5 // pred_region
        %s486 = ssub.s32 %s34, 1
        // Predicated region
        $region13: #{tpu_custom_call.1} parent=11 // pred_check
          %p487 = pneg %p55
        $region14: #{tpu_custom_call.1} parent=11 // pred_check_branch
          %489 = sbr.rel (%p487) target = $region16
        $region15: #{tpu_custom_call.1} parent=11 // pred_region
          _
        $region16: #{tpu_custom_call.1} parent=11 // pred_fallthru
          _
        // Predicated region
        $region17: #{tpu_custom_call.1} parent=11 // pred_check
          %p490 = pneg %p76
        $region18: #{tpu_custom_call.1} parent=11 // pred_check_branch
          %492 = sbr.rel (%p490) target = $region20
        $region19: #{tpu_custom_call.1} parent=11 // pred_region
          _
        $region20: #{tpu_custom_call.1} parent=11 // pred_fallthru
          _
        // Predicated region
        $region21: #{tpu_custom_call.1} parent=11 // pred_check
          %p493 = pneg %p97
        $region22: #{tpu_custom_call.1} parent=11 // pred_check_branch
          %495 = sbr.rel (%p493) target = $region24
        $region23: #{tpu_custom_call.1} parent=11 // pred_region
          %s497 = ssub.s32 2048, 2048
          %498 = vsyncadd [#allocation4], %s497
          %s499 = sshll.u32 [#allocation3], 4
          %s500 = int_to_ptr.vmem [resolvable:$true] %s499
          %505 = dma.hbm_to_vmem [thread:$0]  %s2, 2048, %s500, [#allocation4], 128, 128, 8
        $region24: #{tpu_custom_call.1} parent=11 // pred_fallthru
          _
        // Predicated region
        $region25: #{tpu_custom_call.1} parent=11 // pred_check
          %p506 = pneg %p430
        $region26: #{tpu_custom_call.1} parent=11 // pred_check_branch
          %508 = sbr.rel (%p506) target = $region28
        $region27: #{tpu_custom_call.1} parent=11 // pred_region
          %s510 = ssub.s32 2048, 2048
          %511 = vsyncadd [#allocation13], %s510
          %s512 = sshll.u32 [#allocation14], 4
          %s513 = int_to_ptr.vmem [resolvable:$true] %s512
          %518 = dma.hbm_to_vmem [thread:$0]  %s15, 2048, %s513, [#allocation13], 128, 128, 8
        $region28: #{tpu_custom_call.1} parent=11 // pred_fallthru
          _
        // Predicated region
        $region29: #{tpu_custom_call.1} parent=11 // pred_check
          %p519 = pneg %p451
        $region30: #{tpu_custom_call.1} parent=11 // pred_check_branch
          %521 = sbr.rel (%p519) target = $region32
        $region31: #{tpu_custom_call.1} parent=11 // pred_region
          _
        $region32: #{tpu_custom_call.1} parent=11 // pred_fallthru
          _
      $region12: #{tpu_custom_call.1} parent=5 // pred_fallthru
        _
      %p522 = scmp.lt.s32.totalorder %s34, 3
      // Predicated region
      $region33: #{tpu_custom_call.1} parent=5 // pred_check
        %p523 = pneg %p522
      $region34: #{tpu_custom_call.1} parent=5 // pred_check_branch
        %525 = sbr.rel (%p523) target = $region36
      $region35: #{tpu_custom_call.1} parent=5 // pred_region
        // Predicated region
        $region37: #{tpu_custom_call.1} parent=35 // pred_check
          %p526 = pneg %p117
        $region38: #{tpu_custom_call.1} parent=35 // pred_check_branch
          %528 = sbr.rel (%p526) target = $region40
        $region39: #{tpu_custom_call.1} parent=35 // pred_region
          %s529 = sand.u32 %s34, 1
          %s530 = scalar_lea.sflag [#allocation7], %s529
          %s531 = sand.u32 %s107, 1
          %s532 = smul.addr %s531, 384
          %s533 = scalar_lea.vmem [#allocation6], %s532
          %s535 = ssub.s32 6144, 6144
          %536 = vsyncadd %s530, %s535
          %s537 = smul.addr %s34, 48
          %s538 = smul.addr %s537, 128
          %s539 = scalar_lea.hbm %s3, %s538
          %s540 = sshll.u32 %s533, 4
          %s541 = int_to_ptr.vmem [resolvable:$true] %s540
          %546 = dma.hbm_to_vmem [thread:$0]  %s539, 6144, %s541, %s530, 384, 384, 24
        $region40: #{tpu_custom_call.1} parent=35 // pred_fallthru
          _
        // Predicated region
        $region41: #{tpu_custom_call.1} parent=35 // pred_check
          %p547 = pneg %p143
        $region42: #{tpu_custom_call.1} parent=35 // pred_check_branch
          %549 = sbr.rel (%p547) target = $region44
        $region43: #{tpu_custom_call.1} parent=35 // pred_region
          %s550 = sand.u32 %s34, 1
          %s551 = scalar_lea.sflag [#allocation7], %s550
          %s552 = sand.u32 %s133, 1
          %s553 = smul.addr %s552, 3
          %s554 = scalar_lea.vmem [#allocation8], %s553
          %s556 = ssub.s32 48, 48
          %557 = vsyncadd %s551, %s556
          %s558 = smul.addr %s34, 3
          %s559 = smul.addr %s558, 16
          %s560 = scalar_lea.hbm %s4, %s559
          %s562 = sshll.u32 %s554, 4
          %s563 = int_to_ptr.vmem [resolvable:$true] %s562
          %565 = dma.hbm_to_vmem [thread:$0]  %s560, 48, %s563, %s551
        $region44: #{tpu_custom_call.1} parent=35 // pred_fallthru
          _
        // Predicated region
        $region45: #{tpu_custom_call.1} parent=35 // pred_check
          %p566 = pneg %p169
        $region46: #{tpu_custom_call.1} parent=35 // pred_check_branch
          %568 = sbr.rel (%p566) target = $region48
        $region47: #{tpu_custom_call.1} parent=35 // pred_region
          %s569 = sand.u32 %s34, 1
          %s570 = scalar_lea.sflag [#allocation10], %s569
          %s571 = sand.u32 %s159, 1
          %s572 = smul.addr %s571, 128
          %s573 = scalar_lea.vmem [#allocation9], %s572
          %s575 = ssub.s32 2048, 2048
          %576 = vsyncadd %s570, %s575
          %s577 = smul.addr %s34, 16
          %s578 = smul.addr %s577, 128
          %s579 = scalar_lea.hbm %s5, %s578
          %s580 = sshll.u32 %s573, 4
          %s581 = int_to_ptr.vmem [resolvable:$true] %s580
          %586 = dma.hbm_to_vmem [thread:$0]  %s579, 2048, %s581, %s570, 128, 128, 8
        $region48: #{tpu_custom_call.1} parent=35 // pred_fallthru
          _
        // Predicated region
        $region49: #{tpu_custom_call.1} parent=35 // pred_check
          %p587 = pneg %p195
        $region50: #{tpu_custom_call.1} parent=35 // pred_check_branch
          %589 = sbr.rel (%p587) target = $region52
        $region51: #{tpu_custom_call.1} parent=35 // pred_region
          %p590 = scmp.lt.s32.totalorder %s34, 2
          %s591 = scalar_select %p590, %s34, 2
          %s592 = scalar_lea.vmem %s6, %s591
        $region52: #{tpu_custom_call.1} parent=35 // pred_fallthru
          _
        // Predicated region
        $region53: #{tpu_custom_call.1} parent=35 // pred_check
          %p593 = pneg %p221
        $region54: #{tpu_custom_call.1} parent=35 // pred_check_branch
          %595 = sbr.rel (%p593) target = $region56
        $region55: #{tpu_custom_call.1} parent=35 // pred_region
          %p596 = scmp.lt.s32.totalorder %s34, 2
          %s597 = scalar_select %p596, %s34, 2
          %s598 = scalar_lea.vmem %s7, %s597
        $region56: #{tpu_custom_call.1} parent=35 // pred_fallthru
          _
        // Predicated region
        $region57: #{tpu_custom_call.1} parent=35 // pred_check
          %p599 = pneg %p247
        $region58: #{tpu_custom_call.1} parent=35 // pred_check_branch
          %601 = sbr.rel (%p599) target = $region60
        $region59: #{tpu_custom_call.1} parent=35 // pred_region
          %p602 = scmp.lt.s32.totalorder %s34, 2
          %s603 = scalar_select %p602, %s34, 2
          %s604 = scalar_lea.vmem %s8, %s603
        $region60: #{tpu_custom_call.1} parent=35 // pred_fallthru
          _
        // Predicated region
        $region61: #{tpu_custom_call.1} parent=35 // pred_check
          %p605 = pneg %p273
        $region62: #{tpu_custom_call.1} parent=35 // pred_check_branch
          %607 = sbr.rel (%p605) target = $region64
        $region63: #{tpu_custom_call.1} parent=35 // pred_region
          %s608 = sand.u32 %s34, 1
          %s609 = scalar_lea.sflag [#allocation10], %s608
          %s610 = sand.u32 %s263, 1
          %s611 = smul.addr %s610, 512
          %s612 = scalar_lea.vmem [#allocation11], %s611
          %s614 = ssub.s32 8192, 8192
          %615 = vsyncadd %s609, %s614
          %s616 = smul.addr %s34, 64
          %s617 = smul.addr %s616, 128
          %s618 = scalar_lea.hbm %s9, %s617
          %s619 = sshll.u32 %s612, 4
          %s620 = int_to_ptr.vmem [resolvable:$true] %s619
          %625 = dma.hbm_to_vmem [thread:$0]  %s618, 8192, %s620, %s609, 512, 512, 32
        $region64: #{tpu_custom_call.1} parent=35 // pred_fallthru
          _
        // Predicated region
        $region65: #{tpu_custom_call.1} parent=35 // pred_check
          %p626 = pneg %p299
        $region66: #{tpu_custom_call.1} parent=35 // pred_check_branch
          %628 = sbr.rel (%p626) target = $region68
        $region67: #{tpu_custom_call.1} parent=35 // pred_region
          %p629 = scmp.lt.s32.totalorder %s34, 2
          %s630 = scalar_select %p629, %s34, 2
          %s631 = smul.addr %s630, 4
          %s632 = scalar_lea.vmem %s10, %s631
        $region68: #{tpu_custom_call.1} parent=35 // pred_fallthru
          _
        // Predicated region
        $region69: #{tpu_custom_call.1} parent=35 // pred_check
          %p633 = pneg %p325
        $region70: #{tpu_custom_call.1} parent=35 // pred_check_branch
          %635 = sbr.rel (%p633) target = $region72
        $region71: #{tpu_custom_call.1} parent=35 // pred_region
          %s636 = sand.u32 %s34, 1
          %s637 = scalar_lea.sflag [#allocation13], %s636
          %s638 = sand.u32 %s315, 1
          %s639 = smul.addr %s638, 512
          %s640 = scalar_lea.vmem [#allocation12], %s639
          %s642 = ssub.s32 8192, 8192
          %643 = vsyncadd %s637, %s642
          %s644 = smul.addr %s34, 64
          %s645 = smul.addr %s644, 128
          %s646 = scalar_lea.hbm %s11, %s645
          %s647 = sshll.u32 %s640, 4
          %s648 = int_to_ptr.vmem [resolvable:$true] %s647
          %653 = dma.hbm_to_vmem [thread:$0]  %s646, 8192, %s648, %s637, 128, 128, 8
        $region72: #{tpu_custom_call.1} parent=35 // pred_fallthru
          _
        // Predicated region
        $region73: #{tpu_custom_call.1} parent=35 // pred_check
          %p654 = pneg %p351
        $region74: #{tpu_custom_call.1} parent=35 // pred_check_branch
          %656 = sbr.rel (%p654) target = $region76
        $region75: #{tpu_custom_call.1} parent=35 // pred_region
          %p657 = scmp.lt.s32.totalorder %s34, 2
          %s658 = scalar_select %p657, %s34, 2
          %s659 = scalar_lea.vmem %s12, %s658
        $region76: #{tpu_custom_call.1} parent=35 // pred_fallthru
          _
        // Predicated region
        $region77: #{tpu_custom_call.1} parent=35 // pred_check
          %p660 = pneg %p377
        $region78: #{tpu_custom_call.1} parent=35 // pred_check_branch
          %662 = sbr.rel (%p660) target = $region80
        $region79: #{tpu_custom_call.1} parent=35 // pred_region
          %p663 = scmp.lt.s32.totalorder %s34, 2
          %s664 = scalar_select %p663, %s34, 2
          %s665 = scalar_lea.vmem %s13, %s664
        $region80: #{tpu_custom_call.1} parent=35 // pred_fallthru
          _
        // Predicated region
        $region81: #{tpu_custom_call.1} parent=35 // pred_check
          %p666 = pneg %p403
        $region82: #{tpu_custom_call.1} parent=35 // pred_check_branch
          %668 = sbr.rel (%p666) target = $region84
        $region83: #{tpu_custom_call.1} parent=35 // pred_region
          %p669 = scmp.lt.s32.totalorder %s34, 2
          %s670 = scalar_select %p669, %s34, 2
          %s671 = scalar_lea.vmem %s14, %s670
        $region84: #{tpu_custom_call.1} parent=35 // pred_fallthru
          _
      $region36: #{tpu_custom_call.1} parent=5 // pred_fallthru
        _
      %p672 = scmp.le.s32.totalorder 1, %s34
      %p673 = scmp.lt.s32.totalorder %s34, 4
      %p674 = pnand %p672, %p673
      %p675 = pneg %p674
      // Predicated region
      $region85: #{tpu_custom_call.1} parent=5 // pred_check
        _
      $region86: #{tpu_custom_call.1} parent=5 // pred_check_branch
        %677 = sbr.rel (%p674) target = $region88
      $region87: #{tpu_custom_call.1} parent=5 // pred_region
        %s678 = ssub.s32 %s34, 1
        // Predicated region
        $region89: #{tpu_custom_call.1} parent=87 // pred_check
          %p679 = pneg %p97
        $region90: #{tpu_custom_call.1} parent=87 // pred_check_branch
          %681 = sbr.rel (%p679) target = $region92
        $region91: #{tpu_custom_call.1} parent=87 // pred_region
          %682 = dma.done [#allocation4], 2048
        $region92: #{tpu_custom_call.1} parent=87 // pred_fallthru
          _
        %s683 = sand.u32 %s39, 1
        %s684 = scalar_lea.sflag [#allocation7], %s683
        %s685 = sand.u32 %s110, 1
        %s686 = smul.addr %s685, 384
        %s687 = scalar_lea.vmem [#allocation6], %s686
        // Predicated region
        $region93: #{tpu_custom_call.1} parent=87 // pred_check
          %p688 = pneg %p123
        $region94: #{tpu_custom_call.1} parent=87 // pred_check_branch
          %690 = sbr.rel (%p688) target = $region96
        $region95: #{tpu_custom_call.1} parent=87 // pred_region
          %691 = dma.done %s684, 6144
        $region96: #{tpu_custom_call.1} parent=87 // pred_fallthru
          _
        %s692 = sand.u32 %s39, 1
        %s693 = scalar_lea.sflag [#allocation7], %s692
        %s694 = sand.u32 %s136, 1
        %s695 = smul.addr %s694, 3
        %s696 = scalar_lea.vmem [#allocation8], %s695
        // Predicated region
        $region97: #{tpu_custom_call.1} parent=87 // pred_check
          %p697 = pneg %p149
        $region98: #{tpu_custom_call.1} parent=87 // pred_check_branch
          %699 = sbr.rel (%p697) target = $region100
        $region99: #{tpu_custom_call.1} parent=87 // pred_region
          %700 = dma.done %s693, 48
        $region100: #{tpu_custom_call.1} parent=87 // pred_fallthru
          _
        %s701 = sand.u32 %s39, 1
        %s702 = scalar_lea.sflag [#allocation10], %s701
        %s703 = sand.u32 %s162, 1
        %s704 = smul.addr %s703, 128
        %s705 = scalar_lea.vmem [#allocation9], %s704
        // Predicated region
        $region101: #{tpu_custom_call.1} parent=87 // pred_check
          %p706 = pneg %p175
        $region102: #{tpu_custom_call.1} parent=87 // pred_check_branch
          %708 = sbr.rel (%p706) target = $region104
        $region103: #{tpu_custom_call.1} parent=87 // pred_region
          %709 = dma.done %s702, 2048
        $region104: #{tpu_custom_call.1} parent=87 // pred_fallthru
          _
        %s710 = sand.u32 %s39, 1
        %s711 = scalar_lea.sflag [#allocation10], %s710
        %s712 = sand.u32 %s266, 1
        %s713 = smul.addr %s712, 512
        %s714 = scalar_lea.vmem [#allocation11], %s713
        // Predicated region
        $region105: #{tpu_custom_call.1} parent=87 // pred_check
          %p715 = pneg %p279
        $region106: #{tpu_custom_call.1} parent=87 // pred_check_branch
          %717 = sbr.rel (%p715) target = $region108
        $region107: #{tpu_custom_call.1} parent=87 // pred_region
          %718 = dma.done %s711, 8192
        $region108: #{tpu_custom_call.1} parent=87 // pred_fallthru
          _
        %s719 = sand.u32 %s39, 1
        %s720 = scalar_lea.sflag [#allocation13], %s719
        %s721 = sand.u32 %s318, 1
        %s722 = smul.addr %s721, 512
        %s723 = scalar_lea.vmem [#allocation12], %s722
        // Predicated region
        $region109: #{tpu_custom_call.1} parent=87 // pred_check
          %p724 = pneg %p331
        $region110: #{tpu_custom_call.1} parent=87 // pred_check_branch
          %726 = sbr.rel (%p724) target = $region112
        $region111: #{tpu_custom_call.1} parent=87 // pred_region
          %727 = dma.done %s720, 8192
        $region112: #{tpu_custom_call.1} parent=87 // pred_fallthru
          _
        // Predicated region
        $region113: #{tpu_custom_call.1} parent=87 // pred_check
          %p728 = pneg %p430
        $region114: #{tpu_custom_call.1} parent=87 // pred_check_branch
          %730 = sbr.rel (%p728) target = $region116
        $region115: #{tpu_custom_call.1} parent=87 // pred_region
          %731 = dma.done [#allocation13], 2048
        $region116: #{tpu_custom_call.1} parent=87 // pred_fallthru
          _
        %p732 = pneg %p55
        %p733 = pneg %p52
        %p734 = pneg %p76
        %p735 = pneg %p73
        %p736 = pneg %p97
        %p737 = pneg %p94
        %s738 = sand.u32 %s39, 1
        %s739 = scalar_lea.sflag [#allocation7], %s738
        %s740 = sand.u32 %s110, 1
        %s741 = smul.addr %s740, 384
        %s742 = scalar_lea.vmem [#allocation6], %s741
        %p743 = pneg %p123
        %p744 = pneg %p120
        %s745 = sand.u32 %s39, 1
        %s746 = scalar_lea.sflag [#allocation7], %s745
        %s747 = sand.u32 %s136, 1
        %s748 = smul.addr %s747, 3
        %s749 = scalar_lea.vmem [#allocation8], %s748
        %p750 = pneg %p149
        %p751 = pneg %p146
        %s752 = sand.u32 %s39, 1
        %s753 = scalar_lea.sflag [#allocation10], %s752
        %s754 = sand.u32 %s162, 1
        %s755 = smul.addr %s754, 128
        %s756 = scalar_lea.vmem [#allocation9], %s755
        %p757 = pneg %p175
        %p758 = pneg %p172
        %p759 = scmp.lt.s32.totalorder %s39, 2
        %s760 = scalar_select %p759, %s39, 2
        %s761 = scalar_lea.vmem %s6, %s760
        %p762 = pneg %p201
        %p763 = pneg %p198
        %p764 = scmp.lt.s32.totalorder %s39, 2
        %s765 = scalar_select %p764, %s39, 2
        %s766 = scalar_lea.vmem %s7, %s765
        %p767 = pneg %p227
        %p768 = pneg %p224
        %p769 = scmp.lt.s32.totalorder %s39, 2
        %s770 = scalar_select %p769, %s39, 2
        %s771 = scalar_lea.vmem %s8, %s770
        %p772 = pneg %p253
        %p773 = pneg %p250
        %s774 = sand.u32 %s39, 1
        %s775 = scalar_lea.sflag [#allocation10], %s774
        %s776 = sand.u32 %s266, 1
        %s777 = smul.addr %s776, 512
        %s778 = scalar_lea.vmem [#allocation11], %s777
        %p779 = pneg %p279
        %p780 = pneg %p276
        %p781 = scmp.lt.s32.totalorder %s39, 2
        %s782 = scalar_select %p781, %s39, 2
        %s783 = smul.addr %s782, 4
        %s784 = scalar_lea.vmem %s10, %s783
        %p785 = pneg %p305
        %p786 = pneg %p302
        %s787 = sand.u32 %s39, 1
        %s788 = scalar_lea.sflag [#allocation13], %s787
        %s789 = sand.u32 %s318, 1
        %s790 = smul.addr %s789, 512
        %s791 = scalar_lea.vmem [#allocation12], %s790
        %p792 = pneg %p331
        %p793 = pneg %p328
        %p794 = scmp.lt.s32.totalorder %s39, 2
        %s795 = scalar_select %p794, %s39, 2
        %s796 = scalar_lea.vmem %s12, %s795
        %p797 = pneg %p357
        %p798 = pneg %p354
        %p799 = scmp.lt.s32.totalorder %s39, 2
        %s800 = scalar_select %p799, %s39, 2
        %s801 = scalar_lea.vmem %s13, %s800
        %p802 = pneg %p383
        %p803 = pneg %p380
        %p804 = scmp.lt.s32.totalorder %s39, 2
        %s805 = scalar_select %p804, %s39, 2
        %s806 = scalar_lea.vmem %s14, %s805
        %p807 = pneg %p409
        %p808 = pneg %p406
        %p809 = pneg %p430
        %p810 = pneg %p427
        %p811 = pneg %p451
        %p812 = pneg %p448
        %p813 = pneg %p472
        %p814 = pneg %p469
        %p815 = scmp.lt.s32.totalorder %s39, 2
        %s816 = scalar_select %p815, %s39, 2
        %s817 = scalar_lea.vmem %s6, %s816
        %p818 = scmp.lt.s32.totalorder %s39, 2
        %s819 = scalar_select %p818, %s39, 2
        %s820 = scalar_lea.vmem %s7, %s819
        %p821 = scmp.lt.s32.totalorder %s39, 2
        %s822 = scalar_select %p821, %s39, 2
        %s823 = scalar_lea.vmem %s8, %s822
        %p824 = scmp.lt.s32.totalorder %s39, 2
        %s825 = scalar_select %p824, %s39, 2
        %s826 = smul.addr %s825, 4
        %s827 = scalar_lea.vmem %s10, %s826
        %p828 = scmp.lt.s32.totalorder %s39, 2
        %s829 = scalar_select %p828, %s39, 2
        %s830 = scalar_lea.vmem %s12, %s829
        %p831 = scmp.lt.s32.totalorder %s39, 2
        %s832 = scalar_select %p831, %s39, 2
        %s833 = scalar_lea.vmem %s13, %s832
        %p834 = scmp.lt.s32.totalorder %s39, 2
        %s835 = scalar_select %p834, %s39, 2
        %s836 = scalar_lea.vmem %s14, %s835
        %v837 = vlaneseq
        %v838 = vshrl.u32 %v837, 7
        %v839 = vadd.s32 %v838, 8
        %v840 = vadd.s32 %v838, 16
        %v841 = vadd.s32 %v838, 24
        %v842 = vadd.s32 %v838, 32
        %v843 = vadd.s32 %v838, 40
        %v844 = vadd.s32 %v838, 48
        %v845 = vadd.s32 %v838, 56
        %v846 = vadd.s32 %v838, 64
        %v847 = vadd.s32 %v838, 72
        %v848 = vadd.s32 %v838, 80
        %v849 = vadd.s32 %v838, 88
        %v850 = vadd.s32 %v838, 96
        %v851 = vadd.s32 %v838, 104
        %v852 = vadd.s32 %v838, 112
        %v853 = vadd.s32 %v838, 120
        %v854 = vlaneseq
        %v855 = vand.u32 %v854, 127
        %v856 = vmul.u32 %v855, 16
        %vm857 = vcmp.ge.s32.totalorder %v838, %v856
        %vm858 = vcmp.ge.s32.totalorder %v839, %v856
        %vm859 = vcmp.ge.s32.totalorder %v840, %v856
        %vm860 = vcmp.ge.s32.totalorder %v841, %v856
        %vm861 = vcmp.ge.s32.totalorder %v842, %v856
        %vm862 = vcmp.ge.s32.totalorder %v843, %v856
        %vm863 = vcmp.ge.s32.totalorder %v844, %v856
        %vm864 = vcmp.ge.s32.totalorder %v845, %v856
        %vm865 = vcmp.ge.s32.totalorder %v846, %v856
        %vm866 = vcmp.ge.s32.totalorder %v847, %v856
        %vm867 = vcmp.ge.s32.totalorder %v848, %v856
        %vm868 = vcmp.ge.s32.totalorder %v849, %v856
        %vm869 = vcmp.ge.s32.totalorder %v850, %v856
        %vm870 = vcmp.ge.s32.totalorder %v851, %v856
        %vm871 = vcmp.ge.s32.totalorder %v852, %v856
        %vm872 = vcmp.ge.s32.totalorder %v853, %v856
        %v873 = vadd.s32 %v855, 1
        %v874 = vmul.u32 %v873, 16
        %vm875 = vcmp.lt.s32.totalorder %v838, %v874
        %vm876 = vcmp.lt.s32.totalorder %v839, %v874
        %vm877 = vcmp.lt.s32.totalorder %v840, %v874
        %vm878 = vcmp.lt.s32.totalorder %v841, %v874
        %vm879 = vcmp.lt.s32.totalorder %v842, %v874
        %vm880 = vcmp.lt.s32.totalorder %v843, %v874
        %vm881 = vcmp.lt.s32.totalorder %v844, %v874
        %vm882 = vcmp.lt.s32.totalorder %v845, %v874
        %vm883 = vcmp.lt.s32.totalorder %v846, %v874
        %vm884 = vcmp.lt.s32.totalorder %v847, %v874
        %vm885 = vcmp.lt.s32.totalorder %v848, %v874
        %vm886 = vcmp.lt.s32.totalorder %v849, %v874
        %vm887 = vcmp.lt.s32.totalorder %v850, %v874
        %vm888 = vcmp.lt.s32.totalorder %v851, %v874
        %vm889 = vcmp.lt.s32.totalorder %v852, %v874
        %vm890 = vcmp.lt.s32.totalorder %v853, %v874
        %vm891 = vmand %vm857, %vm875
        %vm892 = vmand %vm858, %vm876
        %vm893 = vmand %vm859, %vm877
        %vm894 = vmand %vm860, %vm878
        %vm895 = vmand %vm861, %vm879
        %vm896 = vmand %vm862, %vm880
        %vm897 = vmand %vm863, %vm881
        %vm898 = vmand %vm864, %vm882
        %vm899 = vmand %vm865, %vm883
        %vm900 = vmand %vm866, %vm884
        %vm901 = vmand %vm867, %vm885
        %vm902 = vmand %vm868, %vm886
        %vm903 = vmand %vm869, %vm887
        %vm904 = vmand %vm870, %vm888
        %vm905 = vmand %vm871, %vm889
        %vm906 = vmand %vm872, %vm890
        %v907 = vsel %vm891, 1, 0
        %v908 = vsel %vm892, 1, 0
        %v909 = vsel %vm893, 1, 0
        %v910 = vsel %vm894, 1, 0
        %v911 = vsel %vm895, 1, 0
        %v912 = vsel %vm896, 1, 0
        %v913 = vsel %vm897, 1, 0
        %v914 = vsel %vm898, 1, 0
        %v915 = vsel %vm899, 1, 0
        %v916 = vsel %vm900, 1, 0
        %v917 = vsel %vm901, 1, 0
        %v918 = vsel %vm902, 1, 0
        %v919 = vsel %vm903, 1, 0
        %v920 = vsel %vm904, 1, 0
        %v921 = vsel %vm905, 1, 0
        %v922 = vsel %vm906, 1, 0
        %v923 = vcvt.s32.f32 %v907
        %v924 = vcvt.s32.f32 %v908
        %v925 = vcvt.s32.f32 %v909
        %v926 = vcvt.s32.f32 %v910
        %v927 = vcvt.s32.f32 %v911
        %v928 = vcvt.s32.f32 %v912
        %v929 = vcvt.s32.f32 %v913
        %v930 = vcvt.s32.f32 %v914
        %v931 = vcvt.s32.f32 %v915
        %v932 = vcvt.s32.f32 %v916
        %v933 = vcvt.s32.f32 %v917
        %v934 = vcvt.s32.f32 %v918
        %v935 = vcvt.s32.f32 %v919
        %v936 = vcvt.s32.f32 %v920
        %v937 = vcvt.s32.f32 %v921
        %v938 = vcvt.s32.f32 %v922
        %v939 = vmul.f32 %v923, 0.25
        %v940 = vmul.f32 %v924, 0.25
        %v941 = vmul.f32 %v925, 0.25
        %v942 = vmul.f32 %v926, 0.25
        %v943 = vmul.f32 %v927, 0.25
        %v944 = vmul.f32 %v928, 0.25
        %v945 = vmul.f32 %v929, 0.25
        %v946 = vmul.f32 %v930, 0.25
        %v947 = vmul.f32 %v931, 0.25
        %v948 = vmul.f32 %v932, 0.25
        %v949 = vmul.f32 %v933, 0.25
        %v950 = vmul.f32 %v934, 0.25
        %v951 = vmul.f32 %v935, 0.25
        %v952 = vmul.f32 %v936, 0.25
        %v953 = vmul.f32 %v937, 0.25
        %v954 = vmul.f32 %v938, 0.25
        %v955 = vmul.u32 %v838, 16
        %vm956 = vcmp.ge.s32.totalorder %v855, %v955
        %v957 = vadd.s32 %v838, 1
        %v958 = vmul.u32 %v957, 16
        %vm959 = vcmp.lt.s32.totalorder %v855, %v958
        %vm960 = vmand %vm956, %vm959
        %v961 = vsel %vm960, 1, 0
        %v962 = vcvt.s32.f32 %v961
        %p963 = scmp.eq.s32.totalorder %s39, 0
        // Predicated region
        $region117: #{tpu_custom_call.1} parent=87 // pred_check
          %p964 = pneg %p963
        $region118: #{tpu_custom_call.1} parent=87 // pred_check_branch
          %966 = sbr.rel (%p964) target = $region120
        $region119: #{tpu_custom_call.1} parent=87 // pred_region
          %v967 = vld [vmem:[%s0] sm:$0xff]
          %v968 = vld [vmem:[%s0 + $0x8] sm:$0xff]
          %969 = vset.pattern.permute.xlu0 0
          %970 = vperm.xlu0 %969, %v967
          %v971 = vpop.permute.xlu0 %970
          %972 = vset.pattern.permute.xlu0 0
          %973 = vperm.xlu0 %972, %v968
          %v974 = vpop.permute.xlu0 %973
          %vm975 = vcmp.eq.s32.totalorder %v855, %v971
          %vm976 = vcmp.eq.s32.totalorder %v855, %v974
          %v977 = vsel %vm975, 1, 0
          %v978 = vsel %vm976, 1, 0
          %v979 = vcvt.s32.f32 %v977
          %v980 = vcvt.s32.f32 %v978
          %v981 = vld [vmem:[#allocation3] sm:$0xff]
          %v982 = vld [vmem:[#allocation3 + $0x8] sm:$0xff]
          %v983 = vld [vmem:[#allocation3 + $0x10] sm:$0xff]
          %v984 = vld [vmem:[#allocation3 + $0x18] sm:$0xff]
          %v985 = vld [vmem:[#allocation3 + $0x20] sm:$0xff]
          %v986 = vld [vmem:[#allocation3 + $0x28] sm:$0xff]
          %v987 = vld [vmem:[#allocation3 + $0x30] sm:$0xff]
          %v988 = vld [vmem:[#allocation3 + $0x38] sm:$0xff]
          %v989 = vld [vmem:[#allocation3 + $0x40] sm:$0xff]
          %v990 = vld [vmem:[#allocation3 + $0x48] sm:$0xff]
          %v991 = vld [vmem:[#allocation3 + $0x50] sm:$0xff]
          %v992 = vld [vmem:[#allocation3 + $0x58] sm:$0xff]
          %v993 = vld [vmem:[#allocation3 + $0x60] sm:$0xff]
          %v994 = vld [vmem:[#allocation3 + $0x68] sm:$0xff]
          %v995 = vld [vmem:[#allocation3 + $0x70] sm:$0xff]
          %v996 = vld [vmem:[#allocation3 + $0x78] sm:$0xff]
          %v997 = vld [vmem:[%s1] sm:$0xff]
          %v998 = vld [vmem:[%s1 + $0x8] sm:$0xff]
          %999 = vmatprep.subr.mxu0 0.0
          %1000 = vmatpush1.msra.mxu0 %v981
          %1001 = vmatprep.subr.mxu0 0.0
          %1002 = vmatpush1.msra.mxu0 %v982
          %1003 = vmatprep.subr.mxu0 0.0
          %1004 = vmatpush1.msra.mxu0 %v983
          %1005 = vmatprep.subr.mxu0 0.0
          %1006 = vmatpush1.msra.mxu0 %v984
          %1007 = vmatprep.subr.mxu0 0.0
          %1008 = vmatpush1.msra.mxu0 %v985
          %1009 = vmatprep.subr.mxu0 0.0
          %1010 = vmatpush1.msra.mxu0 %v986
          %1011 = vmatprep.subr.mxu0 0.0
          %1012 = vmatpush1.msra.mxu0 %v987
          %1013 = vmatprep.subr.mxu0 0.0
          %1014 = vmatpush1.msra.mxu0 %v988
          %1015 = vmatprep.subr.mxu0 0.0
          %1016 = vmatpush1.msra.mxu0 %v989
          %1017 = vmatprep.subr.mxu0 0.0
          %1018 = vmatpush1.msra.mxu0 %v990
          %1019 = vmatprep.subr.mxu0 0.0
          %1020 = vmatpush1.msra.mxu0 %v991
          %1021 = vmatprep.subr.mxu0 0.0
          %1022 = vmatpush1.msra.mxu0 %v992
          %1023 = vmatprep.subr.mxu0 0.0
          %1024 = vmatpush1.msra.mxu0 %v993
          %1025 = vmatprep.subr.mxu0 0.0
          %1026 = vmatpush1.msra.mxu0 %v994
          %1027 = vmatprep.subr.mxu0 0.0
          %1028 = vmatpush1.msra.mxu0 %v995
          %1029 = vmatprep.subr.mxu0 0.0
          %1030 = vmatpush1.msra.mxu0 %v996
          %1031 = vmatprep.subr.mxu0 0.0
          %1032 = vmatpush1.msra.mxu0 0.0
          %1033 = vmatprep.subr.mxu0 0.0
          %1034 = vmatpush1.msra.mxu0 0.0
          %1035 = vmatprep.subr.mxu0 0.0
          %1036 = vmatpush1.msra.mxu0 0.0
          %1037 = vmatprep.subr.mxu0 0.0
          %1038 = vmatpush1.msra.mxu0 0.0
          %1039 = vmatprep.subr.mxu0 0.0
          %1040 = vmatpush1.msra.mxu0 0.0
          %1041 = vmatprep.subr.mxu0 0.0
          %1042 = vmatpush1.msra.mxu0 0.0
          %1043 = vmatprep.subr.mxu0 0.0
          %1044 = vmatpush1.msra.mxu0 0.0
          %1045 = vmatprep.subr.mxu0 0.0
          %1046 = vmatpush1.msra.mxu0 0.0
          %1047 = vmatprep.subr.mxu0 0.0
          %1048 = vmatpush1.msra.mxu0 0.0
          %1049 = vmatprep.subr.mxu0 0.0
          %1050 = vmatpush1.msra.mxu0 0.0
          %1051 = vmatprep.subr.mxu0 0.0
          %1052 = vmatpush1.msra.mxu0 0.0
          %1053 = vmatprep.subr.mxu0 0.0
          %1054 = vmatpush1.msra.mxu0 0.0
          %1055 = vmatprep.subr.mxu0 0.0
          %1056 = vmatpush1.msra.mxu0 0.0
          %1057 = vmatprep.subr.mxu0 0.0
          %1058 = vmatpush1.msra.mxu0 0.0
          %1059 = vmatprep.subr.mxu0 0.0
          %1060 = vmatpush1.msra.mxu0 0.0
          %1061 = vmatprep.subr.mxu0 0.0
          %1062 = vmatpush1.msra.mxu0 0.0
          %1063 = vmatprep.mubr.f32.mxu0 0.0
          %1064 = vmatmul.mubr.f32.gmra.mrb[0].mxu0 %v979
          %v1065 = vpop.f32.mrb[0].mxu0
          %v1066 = vadd.f32 %v997, %v1065
          %v1067 = vpop.f32.mrb[0].mxu0
          %1068 = vmatprep.mubr.f32.mxu0 0.0
          %1069 = vmatmul.mubr.f32.gmra.mrb[0].mxu0 %v980
          %v1070 = vpop.f32.mrb[0].mxu0
          %v1071 = vadd.f32 %v998, %v1070
          %v1072 = vpop.f32.mrb[0].mxu0
          %1073 = vdwg.mxu0
          %1074 = vst [vmem:[#allocation2] sm:$0xff] %v1066
          %1075 = vst [vmem:[#allocation2 + $0x8] sm:$0xff] %v1071
        $region120: #{tpu_custom_call.1} parent=87 // pred_fallthru
          _
        %v1076 = vld [vmem:[#allocation2] sm:$0xff]
        %v1077 = vld [vmem:[#allocation2 + $0x8] sm:$0xff]
        %v1078 = vld [vmem:[%s687] sm:$0xff]
        %v1079 = vld [vmem:[%s687 + $0x8] sm:$0xff]
        %v1080 = vld [vmem:[%s687 + $0x10] sm:$0xff]
        %v1081 = vld [vmem:[%s687 + $0x18] sm:$0xff]
        %v1082 = vld [vmem:[%s687 + $0x20] sm:$0xff]
        %v1083 = vld [vmem:[%s687 + $0x28] sm:$0xff]
        %v1084 = vld [vmem:[%s687 + $0x30] sm:$0xff]
        %v1085 = vld [vmem:[%s687 + $0x38] sm:$0xff]
        %v1086 = vld [vmem:[%s687 + $0x40] sm:$0xff]
        %v1087 = vld [vmem:[%s687 + $0x48] sm:$0xff]
        %v1088 = vld [vmem:[%s687 + $0x50] sm:$0xff]
        %v1089 = vld [vmem:[%s687 + $0x58] sm:$0xff]
        %v1090 = vld [vmem:[%s687 + $0x60] sm:$0xff]
        %v1091 = vld [vmem:[%s687 + $0x68] sm:$0xff]
        %v1092 = vld [vmem:[%s687 + $0x70] sm:$0xff]
        %v1093 = vld [vmem:[%s687 + $0x78] sm:$0xff]
        %v1094 = vld [vmem:[%s687 + $0x80] sm:$0xff]
        %v1095 = vld [vmem:[%s687 + $0x88] sm:$0xff]
        %v1096 = vld [vmem:[%s687 + $0x90] sm:$0xff]
        %v1097 = vld [vmem:[%s687 + $0x98] sm:$0xff]
        %v1098 = vld [vmem:[%s687 + $0xa0] sm:$0xff]
        %v1099 = vld [vmem:[%s687 + $0xa8] sm:$0xff]
        %v1100 = vld [vmem:[%s687 + $0xb0] sm:$0xff]
        %v1101 = vld [vmem:[%s687 + $0xb8] sm:$0xff]
        %v1102 = vld [vmem:[%s687 + $0xc0] sm:$0xff]
        %v1103 = vld [vmem:[%s687 + $0xc8] sm:$0xff]
        %v1104 = vld [vmem:[%s687 + $0xd0] sm:$0xff]
        %v1105 = vld [vmem:[%s687 + $0xd8] sm:$0xff]
        %v1106 = vld [vmem:[%s687 + $0xe0] sm:$0xff]
        %v1107 = vld [vmem:[%s687 + $0xe8] sm:$0xff]
        %v1108 = vld [vmem:[%s687 + $0xf0] sm:$0xff]
        %v1109 = vld [vmem:[%s687 + $0xf8] sm:$0xff]
        %v1110 = vld [vmem:[%s687 + $0x100] sm:$0xff]
        %v1111 = vld [vmem:[%s687 + $0x108] sm:$0xff]
        %v1112 = vld [vmem:[%s687 + $0x110] sm:$0xff]
        %v1113 = vld [vmem:[%s687 + $0x118] sm:$0xff]
        %v1114 = vld [vmem:[%s687 + $0x120] sm:$0xff]
        %v1115 = vld [vmem:[%s687 + $0x128] sm:$0xff]
        %v1116 = vld [vmem:[%s687 + $0x130] sm:$0xff]
        %v1117 = vld [vmem:[%s687 + $0x138] sm:$0xff]
        %v1118 = vld [vmem:[%s687 + $0x140] sm:$0xff]
        %v1119 = vld [vmem:[%s687 + $0x148] sm:$0xff]
        %v1120 = vld [vmem:[%s687 + $0x150] sm:$0xff]
        %v1121 = vld [vmem:[%s687 + $0x158] sm:$0xff]
        %v1122 = vld [vmem:[%s687 + $0x160] sm:$0xff]
        %v1123 = vld [vmem:[%s687 + $0x168] sm:$0xff]
        %v1124 = vld [vmem:[%s687 + $0x170] sm:$0xff]
        %v1125 = vld [vmem:[%s687 + $0x178] sm:$0xff]
        %v1126 = vld [vmem:[%s696] sm:$0x7]
        %v1128 = vlaneseq
        %v1129 = vshrl.u32 %v1128, 7
        %v1130 = vsub.s32 0, %v1129
        %v1131 = vrot.slane %v1126, %v1130
        %v1132 = vlaneseq
        %v1133 = vshrl.u32 %v1132, 7
        %v1134 = vsub.s32 1, %v1133
        %v1135 = vrot.slane %v1126, %v1134
        %v1136 = vlaneseq
        %v1137 = vshrl.u32 %v1136, 7
        %v1138 = vsub.s32 2, %v1137
        %v1139 = vrot.slane %v1126, %v1138
        %1143 = vmatprep.subr.mxu0 %v1079
        %1144 = vmatpush1.msra.mxu0 %v1078
        %1145 = vmatprep.subr.mxu0 %v1082
        %1146 = vmatpush1.msra.mxu0 %v1081
        %1147 = vmatprep.subr.mxu0 %v1085
        %1148 = vmatpush1.msra.mxu0 %v1084
        %1149 = vmatprep.subr.mxu0 %v1088
        %1150 = vmatpush1.msra.mxu0 %v1087
        %1151 = vmatprep.subr.mxu0 %v1091
        %1152 = vmatpush1.msra.mxu0 %v1090
        %1153 = vmatprep.subr.mxu0 %v1094
        %1154 = vmatpush1.msra.mxu0 %v1093
        %1155 = vmatprep.subr.mxu0 %v1097
        %1156 = vmatpush1.msra.mxu0 %v1096
        %1157 = vmatprep.subr.mxu0 %v1100
        %1158 = vmatpush1.msra.mxu0 %v1099
        %1159 = vmatprep.subr.mxu0 %v1103
        %1160 = vmatpush1.msra.mxu0 %v1102
        %1161 = vmatprep.subr.mxu0 %v1106
        %1162 = vmatpush1.msra.mxu0 %v1105
        %1163 = vmatprep.subr.mxu0 %v1109
        %1164 = vmatpush1.msra.mxu0 %v1108
        %1165 = vmatprep.subr.mxu0 %v1112
        %1166 = vmatpush1.msra.mxu0 %v1111
        %1167 = vmatprep.subr.mxu0 %v1115
        %1168 = vmatpush1.msra.mxu0 %v1114
        %1169 = vmatprep.subr.mxu0 %v1118
        %1170 = vmatpush1.msra.mxu0 %v1117
        %1171 = vmatprep.subr.mxu0 %v1121
        %1172 = vmatpush1.msra.mxu0 %v1120
        %1173 = vmatprep.subr.mxu0 %v1124
        %1174 = vmatpush1.msra.mxu0 %v1123
        %1175 = vmatprep.subr.mxu0 0.0
        %1176 = vmatpush1.msra.mxu0 0.0
        %1177 = vmatprep.subr.mxu0 0.0
        %1178 = vmatpush1.msra.mxu0 0.0
        %1179 = vmatprep.subr.mxu0 0.0
        %1180 = vmatpush1.msra.mxu0 0.0
        %1181 = vmatprep.subr.mxu0 0.0
        %1182 = vmatpush1.msra.mxu0 0.0
        %1183 = vmatprep.subr.mxu0 0.0
        %1184 = vmatpush1.msra.mxu0 0.0
        %1185 = vmatprep.subr.mxu0 0.0
        %1186 = vmatpush1.msra.mxu0 0.0
        %1187 = vmatprep.subr.mxu0 0.0
        %1188 = vmatpush1.msra.mxu0 0.0
        %1189 = vmatprep.subr.mxu0 0.0
        %1190 = vmatpush1.msra.mxu0 0.0
        %1191 = vmatprep.subr.mxu0 0.0
        %1192 = vmatpush1.msra.mxu0 0.0
        %1193 = vmatprep.subr.mxu0 0.0
        %1194 = vmatpush1.msra.mxu0 0.0
        %1195 = vmatprep.subr.mxu0 0.0
        %1196 = vmatpush1.msra.mxu0 0.0
        %1197 = vmatprep.subr.mxu0 0.0
        %1198 = vmatpush1.msra.mxu0 0.0
        %1199 = vmatprep.subr.mxu0 0.0
        %1200 = vmatpush1.msra.mxu0 0.0
        %1201 = vmatprep.subr.mxu0 0.0
        %1202 = vmatpush1.msra.mxu0 0.0
        %1203 = vmatprep.subr.mxu0 0.0
        %1204 = vmatpush1.msra.mxu0 0.0
        %1205 = vmatprep.subr.mxu0 0.0
        %1206 = vmatpush1.msra.mxu0 0.0
        %1207 = vmatprep.mubr.f32.mxu0 0.0
        %1208 = vmatmul.mubr.f32.gmra.mrb[0].mxu0 %v1076
        %v1209 = vpop.f32.mrb[0].mxu0
        %v1210 = vadd.f32 %v1131, %v1209
        %v1211 = vpop.f32.mrb[0].mxu0
        %v1212 = vadd.f32 %v1135, %v1211
        %1213 = vmatprep.mubr.f32.mxu0 0.0
        %1214 = vmatmul.mubr.f32.gmra.mrb[0].mxu0 %v1077
        %v1215 = vpop.f32.mrb[0].mxu0
        %v1216 = vadd.f32 %v1131, %v1215
        %v1217 = vpop.f32.mrb[0].mxu0
        %v1218 = vadd.f32 %v1135, %v1217
        %1219 = vdwg.mxu0
        %1220 = vmatprep.subr.mxu0 0.0
        %1221 = vmatpush1.msra.mxu0 %v1080
        %1222 = vmatprep.subr.mxu0 0.0
        %1223 = vmatpush1.msra.mxu0 %v1083
        %1224 = vmatprep.subr.mxu0 0.0
        %1225 = vmatpush1.msra.mxu0 %v1086
        %1226 = vmatprep.subr.mxu0 0.0
        %1227 = vmatpush1.msra.mxu0 %v1089
        %1228 = vmatprep.subr.mxu0 0.0
        %1229 = vmatpush1.msra.mxu0 %v1092
        %1230 = vmatprep.subr.mxu0 0.0
        %1231 = vmatpush1.msra.mxu0 %v1095
        %1232 = vmatprep.subr.mxu0 0.0
        %1233 = vmatpush1.msra.mxu0 %v1098
        %1234 = vmatprep.subr.mxu0 0.0
        %1235 = vmatpush1.msra.mxu0 %v1101
        %1236 = vmatprep.subr.mxu0 0.0
        %1237 = vmatpush1.msra.mxu0 %v1104
        %1238 = vmatprep.subr.mxu0 0.0
        %1239 = vmatpush1.msra.mxu0 %v1107
        %1240 = vmatprep.subr.mxu0 0.0
        %1241 = vmatpush1.msra.mxu0 %v1110
        %1242 = vmatprep.subr.mxu0 0.0
        %1243 = vmatpush1.msra.mxu0 %v1113
        %1244 = vmatprep.subr.mxu0 0.0
        %1245 = vmatpush1.msra.mxu0 %v1116
        %1246 = vmatprep.subr.mxu0 0.0
        %1247 = vmatpush1.msra.mxu0 %v1119
        %1248 = vmatprep.subr.mxu0 0.0
        %1249 = vmatpush1.msra.mxu0 %v1122
        %1250 = vmatprep.subr.mxu0 0.0
        %1251 = vmatpush1.msra.mxu0 %v1125
        %1252 = vmatprep.subr.mxu0 0.0
        %1253 = vmatpush1.msra.mxu0 0.0
        %1254 = vmatprep.subr.mxu0 0.0
        %1255 = vmatpush1.msra.mxu0 0.0
        %1256 = vmatprep.subr.mxu0 0.0
        %1257 = vmatpush1.msra.mxu0 0.0
        %1258 = vmatprep.subr.mxu0 0.0
        %1259 = vmatpush1.msra.mxu0 0.0
        %1260 = vmatprep.subr.mxu0 0.0
        %1261 = vmatpush1.msra.mxu0 0.0
        %1262 = vmatprep.subr.mxu0 0.0
        %1263 = vmatpush1.msra.mxu0 0.0
        %1264 = vmatprep.subr.mxu0 0.0
        %1265 = vmatpush1.msra.mxu0 0.0
        %1266 = vmatprep.subr.mxu0 0.0
        %1267 = vmatpush1.msra.mxu0 0.0
        %1268 = vmatprep.subr.mxu0 0.0
        %1269 = vmatpush1.msra.mxu0 0.0
        %1270 = vmatprep.subr.mxu0 0.0
        %1271 = vmatpush1.msra.mxu0 0.0
        %1272 = vmatprep.subr.mxu0 0.0
        %1273 = vmatpush1.msra.mxu0 0.0
        %1274 = vmatprep.subr.mxu0 0.0
        %1275 = vmatpush1.msra.mxu0 0.0
        %1276 = vmatprep.subr.mxu0 0.0
        %1277 = vmatpush1.msra.mxu0 0.0
        %1278 = vmatprep.subr.mxu0 0.0
        %1279 = vmatpush1.msra.mxu0 0.0
        %1280 = vmatprep.subr.mxu0 0.0
        %1281 = vmatpush1.msra.mxu0 0.0
        %1282 = vmatprep.subr.mxu0 0.0
        %1283 = vmatpush1.msra.mxu0 0.0
        %1284 = vmatprep.mubr.f32.mxu0 0.0
        %1285 = vmatmul.mubr.f32.gmra.mrb[0].mxu0 %v1076
        %v1286 = vpop.f32.mrb[0].mxu0
        %v1287 = vadd.f32 %v1139, %v1286
        %v1288 = vpop.f32.mrb[0].mxu0
        %1289 = vmatprep.mubr.f32.mxu0 0.0
        %1290 = vmatmul.mubr.f32.gmra.mrb[0].mxu0 %v1077
        %v1291 = vpop.f32.mrb[0].mxu0
        %v1292 = vadd.f32 %v1139, %v1291
        %v1293 = vpop.f32.mrb[0].mxu0
        %1294 = vdwg.mxu0
        %v1295 = vmul.f32 %v1210, %v1212
        %v1296 = vmul.f32 %v1210, %v1218
        %v1297 = vmul.f32 %v1216, %v1212
        %v1298 = vmul.f32 %v1216, %v1218
        %1299 = vmatprep.subr.mxu0 0.0
        %1300 = vmatpush1.msra.mxu0 %v939
        %1301 = vmatprep.subr.mxu0 0.0
        %1302 = vmatpush1.msra.mxu0 %v940
        %1303 = vmatprep.subr.mxu0 0.0
        %1304 = vmatpush1.msra.mxu0 %v941
        %1305 = vmatprep.subr.mxu0 0.0
        %1306 = vmatpush1.msra.mxu0 %v942
        %1307 = vmatprep.subr.mxu0 0.0
        %1308 = vmatpush1.msra.mxu0 %v943
        %1309 = vmatprep.subr.mxu0 0.0
        %1310 = vmatpush1.msra.mxu0 %v944
        %1311 = vmatprep.subr.mxu0 0.0
        %1312 = vmatpush1.msra.mxu0 %v945
        %1313 = vmatprep.subr.mxu0 0.0
        %1314 = vmatpush1.msra.mxu0 %v946
        %1315 = vmatprep.subr.mxu0 0.0
        %1316 = vmatpush1.msra.mxu0 %v947
        %1317 = vmatprep.subr.mxu0 0.0
        %1318 = vmatpush1.msra.mxu0 %v948
        %1319 = vmatprep.subr.mxu0 0.0
        %1320 = vmatpush1.msra.mxu0 %v949
        %1321 = vmatprep.subr.mxu0 0.0
        %1322 = vmatpush1.msra.mxu0 %v950
        %1323 = vmatprep.subr.mxu0 0.0
        %1324 = vmatpush1.msra.mxu0 %v951
        %1325 = vmatprep.subr.mxu0 0.0
        %1326 = vmatpush1.msra.mxu0 %v952
        %1327 = vmatprep.subr.mxu0 0.0
        %1328 = vmatpush1.msra.mxu0 %v953
        %1329 = vmatprep.subr.mxu0 0.0
        %1330 = vmatpush1.msra.mxu0 %v954
        %1331 = vmatprep.subr.mxu0 0.0
        %1332 = vmatpush1.msra.mxu0 0.0
        %1333 = vmatprep.subr.mxu0 0.0
        %1334 = vmatpush1.msra.mxu0 0.0
        %1335 = vmatprep.subr.mxu0 0.0
        %1336 = vmatpush1.msra.mxu0 0.0
        %1337 = vmatprep.subr.mxu0 0.0
        %1338 = vmatpush1.msra.mxu0 0.0
        %1339 = vmatprep.subr.mxu0 0.0
        %1340 = vmatpush1.msra.mxu0 0.0
        %1341 = vmatprep.subr.mxu0 0.0
        %1342 = vmatpush1.msra.mxu0 0.0
        %1343 = vmatprep.subr.mxu0 0.0
        %1344 = vmatpush1.msra.mxu0 0.0
        %1345 = vmatprep.subr.mxu0 0.0
        %1346 = vmatpush1.msra.mxu0 0.0
        %1347 = vmatprep.subr.mxu0 0.0
        %1348 = vmatpush1.msra.mxu0 0.0
        %1349 = vmatprep.subr.mxu0 0.0
        %1350 = vmatpush1.msra.mxu0 0.0
        %1351 = vmatprep.subr.mxu0 0.0
        %1352 = vmatpush1.msra.mxu0 0.0
        %1353 = vmatprep.subr.mxu0 0.0
        %1354 = vmatpush1.msra.mxu0 0.0
        %1355 = vmatprep.subr.mxu0 0.0
        %1356 = vmatpush1.msra.mxu0 0.0
        %1357 = vmatprep.subr.mxu0 0.0
        %1358 = vmatpush1.msra.mxu0 0.0
        %1359 = vmatprep.subr.mxu0 0.0
        %1360 = vmatpush1.msra.mxu0 0.0
        %1361 = vmatprep.subr.mxu0 0.0
        %1362 = vmatpush1.msra.mxu0 0.0
        %1363 = vmatprep.mubr.f32.mxu0 0.0
        %1364 = vmatmul.mubr.f32.gmra.mrb[0].mxu0 %v1295
        %v1365 = vpop.f32.mrb[0].mxu0
        %v1366 = vadd.f32 0.0, %v1365
        %v1367 = vpop.f32.mrb[0].mxu0
        %1368 = vmatprep.mubr.f32.mxu0 0.0
        %1369 = vmatmul.mubr.f32.gmra.mrb[0].mxu0 %v1296
        %v1370 = vpop.f32.mrb[0].mxu0
        %v1371 = vadd.f32 0.0, %v1370
        %v1372 = vpop.f32.mrb[0].mxu0
        %1373 = vmatprep.mubr.f32.mxu0 0.0
        %1374 = vmatmul.mubr.f32.gmra.mrb[0].mxu0 %v1297
        %v1375 = vpop.f32.mrb[0].mxu0
        %v1376 = vadd.f32 0.0, %v1375
        %v1377 = vpop.f32.mrb[0].mxu0
        %1378 = vmatprep.mubr.f32.mxu0 0.0
        %1379 = vmatmul.mubr.f32.gmra.mrb[0].mxu0 %v1298
        %v1380 = vpop.f32.mrb[0].mxu0
        %v1381 = vadd.f32 0.0, %v1380
        %v1382 = vpop.f32.mrb[0].mxu0
        %1383 = vdwg.mxu0
        %vm1384 = vcmask 64512
        %v1385 = vsel %vm1384, %v1366, -inf
        %v1386 = vsel %vm1384, %v1371, -inf
        %v1387 = vmax.f32 %v1385, %v1386
        %v1388 = vsel %vm1384, %v1376, -inf
        %v1389 = vsel %vm1384, %v1381, -inf
        %v1390 = vmax.f32 %v1388, %v1389
        %v1391 = vsub.f32 %v1366, %v1387
        %v1392 = vsub.f32 %v1371, %v1387
        %v1393 = vsub.f32 %v1376, %v1390
        %v1394 = vsub.f32 %v1381, %v1390
        %v1395 = vmul.f32 %v1391, 1.442695
        %v1396 = vpow.pop %v1395
        %v1397 = vmul.f32 %v1392, 1.442695
        %v1398 = vpow.pop %v1397
        %v1399 = vmul.f32 %v1393, 1.442695
        %v1400 = vpow.pop %v1399
        %v1401 = vmul.f32 %v1394, 1.442695
        %v1402 = vpow.pop %v1401
        %v1403 = vsel %vm1384, %v1396, 0.0
        %v1404 = vsel %vm1384, %v1398, 0.0
        %v1405 = vadd.f32 %v1403, %v1404
        %v1406 = vsel %vm1384, %v1400, 0.0
        %v1407 = vsel %vm1384, %v1402, 0.0
        %v1408 = vadd.f32 %v1406, %v1407
        %v1409 = vrcp.pop %v1405
        %v1410 = vrcp.pop %v1408
        %v1411 = vmul.f32 %v1396, %v1409
        %v1412 = vmul.f32 %v1398, %v1409
        %v1413 = vmul.f32 %v1400, %v1410
        %v1414 = vmul.f32 %v1402, %v1410
        %v1416 = vsel %vm1384, %v1411, 0
        %v1419 = vsel %vm1384, %v1412, 0
        %v1422 = vsel %vm1384, %v1413, 0
        %v1425 = vsel %vm1384, %v1414, 0
        %1427 = vmatprep.subr.mxu0 0.0
        %1428 = vmatpush1.msra.mxu0 %v962
        %1429 = vmatprep.subr.mxu0 0.0
        %1430 = vmatpush1.msra.mxu0 0.0
        %1431 = vmatprep.subr.mxu0 0.0
        %1432 = vmatpush1.msra.mxu0 0.0
        %1433 = vmatprep.subr.mxu0 0.0
        %1434 = vmatpush1.msra.mxu0 0.0
        %1435 = vmatprep.subr.mxu0 0.0
        %1436 = vmatpush1.msra.mxu0 0.0
        %1437 = vmatprep.subr.mxu0 0.0
        %1438 = vmatpush1.msra.mxu0 0.0
        %1439 = vmatprep.subr.mxu0 0.0
        %1440 = vmatpush1.msra.mxu0 0.0
        %1441 = vmatprep.subr.mxu0 0.0
        %1442 = vmatpush1.msra.mxu0 0.0
        %1443 = vmatprep.subr.mxu0 0.0
        %1444 = vmatpush1.msra.mxu0 0.0
        %1445 = vmatprep.subr.mxu0 0.0
        %1446 = vmatpush1.msra.mxu0 0.0
        %1447 = vmatprep.subr.mxu0 0.0
        %1448 = vmatpush1.msra.mxu0 0.0
        %1449 = vmatprep.subr.mxu0 0.0
        %1450 = vmatpush1.msra.mxu0 0.0
        %1451 = vmatprep.subr.mxu0 0.0
        %1452 = vmatpush1.msra.mxu0 0.0
        %1453 = vmatprep.subr.mxu0 0.0
        %1454 = vmatpush1.msra.mxu0 0.0
        %1455 = vmatprep.subr.mxu0 0.0
        %1456 = vmatpush1.msra.mxu0 0.0
        %1457 = vmatprep.subr.mxu0 0.0
        %1458 = vmatpush1.msra.mxu0 0.0
        %1459 = vmatprep.subr.mxu0 0.0
        %1460 = vmatpush1.msra.mxu0 0.0
        %1461 = vmatprep.subr.mxu0 0.0
        %1462 = vmatpush1.msra.mxu0 0.0
        %1463 = vmatprep.subr.mxu0 0.0
        %1464 = vmatpush1.msra.mxu0 0.0
        %1465 = vmatprep.subr.mxu0 0.0
        %1466 = vmatpush1.msra.mxu0 0.0
        %1467 = vmatprep.subr.mxu0 0.0
        %1468 = vmatpush1.msra.mxu0 0.0
        %1469 = vmatprep.subr.mxu0 0.0
        %1470 = vmatpush1.msra.mxu0 0.0
        %1471 = vmatprep.subr.mxu0 0.0
        %1472 = vmatpush1.msra.mxu0 0.0
        %1473 = vmatprep.subr.mxu0 0.0
        %1474 = vmatpush1.msra.mxu0 0.0
        %1475 = vmatprep.subr.mxu0 0.0
        %1476 = vmatpush1.msra.mxu0 0.0
        %1477 = vmatprep.subr.mxu0 0.0
        %1478 = vmatpush1.msra.mxu0 0.0
        %1479 = vmatprep.subr.mxu0 0.0
        %1480 = vmatpush1.msra.mxu0 0.0
        %1481 = vmatprep.subr.mxu0 0.0
        %1482 = vmatpush1.msra.mxu0 0.0
        %1483 = vmatprep.subr.mxu0 0.0
        %1484 = vmatpush1.msra.mxu0 0.0
        %1485 = vmatprep.subr.mxu0 0.0
        %1486 = vmatpush1.msra.mxu0 0.0
        %1487 = vmatprep.subr.mxu0 0.0
        %1488 = vmatpush1.msra.mxu0 0.0
        %1489 = vmatprep.subr.mxu0 0.0
        %1490 = vmatpush1.msra.mxu0 0.0
        %1491 = vmatprep.mubr.f32.mxu0 0.0
        %1492 = vmatmul.mubr.f32.gmra.mrb[0].mxu0 %v1416
        %v1493 = vpop.f32.mrb[0].mxu0
        %v1494 = vadd.f32 0.0, %v1493
        %v1495 = vpop.f32.mrb[0].mxu0
        %1496 = vmatprep.mubr.f32.mxu0 0.0
        %1497 = vmatmul.mubr.f32.gmra.mrb[0].mxu0 %v1419
        %v1498 = vpop.f32.mrb[0].mxu0
        %v1499 = vadd.f32 0.0, %v1498
        %v1500 = vpop.f32.mrb[0].mxu0
        %1501 = vmatprep.mubr.f32.mxu0 0.0
        %1502 = vmatmul.mubr.f32.gmra.mrb[0].mxu0 %v1422
        %v1503 = vpop.f32.mrb[0].mxu0
        %v1504 = vadd.f32 0.0, %v1503
        %v1505 = vpop.f32.mrb[0].mxu0
        %1506 = vmatprep.mubr.f32.mxu0 0.0
        %1507 = vmatmul.mubr.f32.gmra.mrb[0].mxu0 %v1425
        %v1508 = vpop.f32.mrb[0].mxu0
        %v1509 = vadd.f32 0.0, %v1508
        %v1510 = vpop.f32.mrb[0].mxu0
        %1511 = vdwg.mxu0
        %v1512 = vmul.f32 %v1494, %v1287
        %v1513 = vmul.f32 %v1499, %v1292
        %v1514 = vmul.f32 %v1504, %v1287
        %v1515 = vmul.f32 %v1509, %v1292
        %v1516 = vadd.f32 %v1512, %v1513
        %v1517 = vadd.f32 %v1514, %v1515
        %v1518 = vld [vmem:[%s705] sm:$0xff]
        %v1519 = vld [vmem:[%s705 + $0x8] sm:$0xff]
        %v1520 = vld [vmem:[%s705 + $0x10] sm:$0xff]
        %v1521 = vld [vmem:[%s705 + $0x18] sm:$0xff]
        %v1522 = vld [vmem:[%s705 + $0x20] sm:$0xff]
        %v1523 = vld [vmem:[%s705 + $0x28] sm:$0xff]
        %v1524 = vld [vmem:[%s705 + $0x30] sm:$0xff]
        %v1525 = vld [vmem:[%s705 + $0x38] sm:$0xff]
        %v1526 = vld [vmem:[%s705 + $0x40] sm:$0xff]
        %v1527 = vld [vmem:[%s705 + $0x48] sm:$0xff]
        %v1528 = vld [vmem:[%s705 + $0x50] sm:$0xff]
        %v1529 = vld [vmem:[%s705 + $0x58] sm:$0xff]
        %v1530 = vld [vmem:[%s705 + $0x60] sm:$0xff]
        %v1531 = vld [vmem:[%s705 + $0x68] sm:$0xff]
        %v1532 = vld [vmem:[%s705 + $0x70] sm:$0xff]
        %v1533 = vld [vmem:[%s705 + $0x78] sm:$0xff]
        %v1534 = vld [vmem:[%s817] sm:$0x1]
        %v1536 = vlaneseq
        %v1537 = vshrl.u32 %v1536, 7
        %v1538 = vsub.s32 0, %v1537
        %v1539 = vrot.slane %v1534, %v1538
        %1541 = vmatprep.subr.mxu0 0.0
        %1542 = vmatpush1.msra.mxu0 %v1518
        %1543 = vmatprep.subr.mxu0 0.0
        %1544 = vmatpush1.msra.mxu0 %v1519
        %1545 = vmatprep.subr.mxu0 0.0
        %1546 = vmatpush1.msra.mxu0 %v1520
        %1547 = vmatprep.subr.mxu0 0.0
        %1548 = vmatpush1.msra.mxu0 %v1521
        %1549 = vmatprep.subr.mxu0 0.0
        %1550 = vmatpush1.msra.mxu0 %v1522
        %1551 = vmatprep.subr.mxu0 0.0
        %1552 = vmatpush1.msra.mxu0 %v1523
        %1553 = vmatprep.subr.mxu0 0.0
        %1554 = vmatpush1.msra.mxu0 %v1524
        %1555 = vmatprep.subr.mxu0 0.0
        %1556 = vmatpush1.msra.mxu0 %v1525
        %1557 = vmatprep.subr.mxu0 0.0
        %1558 = vmatpush1.msra.mxu0 %v1526
        %1559 = vmatprep.subr.mxu0 0.0
        %1560 = vmatpush1.msra.mxu0 %v1527
        %1561 = vmatprep.subr.mxu0 0.0
        %1562 = vmatpush1.msra.mxu0 %v1528
        %1563 = vmatprep.subr.mxu0 0.0
        %1564 = vmatpush1.msra.mxu0 %v1529
        %1565 = vmatprep.subr.mxu0 0.0
        %1566 = vmatpush1.msra.mxu0 %v1530
        %1567 = vmatprep.subr.mxu0 0.0
        %1568 = vmatpush1.msra.mxu0 %v1531
        %1569 = vmatprep.subr.mxu0 0.0
        %1570 = vmatpush1.msra.mxu0 %v1532
        %1571 = vmatprep.subr.mxu0 0.0
        %1572 = vmatpush1.msra.mxu0 %v1533
        %1573 = vmatprep.subr.mxu0 0.0
        %1574 = vmatpush1.msra.mxu0 0.0
        %1575 = vmatprep.subr.mxu0 0.0
        %1576 = vmatpush1.msra.mxu0 0.0
        %1577 = vmatprep.subr.mxu0 0.0
        %1578 = vmatpush1.msra.mxu0 0.0
        %1579 = vmatprep.subr.mxu0 0.0
        %1580 = vmatpush1.msra.mxu0 0.0
        %1581 = vmatprep.subr.mxu0 0.0
        %1582 = vmatpush1.msra.mxu0 0.0
        %1583 = vmatprep.subr.mxu0 0.0
        %1584 = vmatpush1.msra.mxu0 0.0
        %1585 = vmatprep.subr.mxu0 0.0
        %1586 = vmatpush1.msra.mxu0 0.0
        %1587 = vmatprep.subr.mxu0 0.0
        %1588 = vmatpush1.msra.mxu0 0.0
        %1589 = vmatprep.subr.mxu0 0.0
        %1590 = vmatpush1.msra.mxu0 0.0
        %1591 = vmatprep.subr.mxu0 0.0
        %1592 = vmatpush1.msra.mxu0 0.0
        %1593 = vmatprep.subr.mxu0 0.0
        %1594 = vmatpush1.msra.mxu0 0.0
        %1595 = vmatprep.subr.mxu0 0.0
        %1596 = vmatpush1.msra.mxu0 0.0
        %1597 = vmatprep.subr.mxu0 0.0
        %1598 = vmatpush1.msra.mxu0 0.0
        %1599 = vmatprep.subr.mxu0 0.0
        %1600 = vmatpush1.msra.mxu0 0.0
        %1601 = vmatprep.subr.mxu0 0.0
        %1602 = vmatpush1.msra.mxu0 0.0
        %1603 = vmatprep.subr.mxu0 0.0
        %1604 = vmatpush1.msra.mxu0 0.0
        %1605 = vmatprep.mubr.f32.mxu0 0.0
        %1606 = vmatmul.mubr.f32.gmra.mrb[0].mxu0 %v1516
        %v1607 = vpop.f32.mrb[0].mxu0
        %v1608 = vadd.f32 %v1539, %v1607
        %v1609 = vpop.f32.mrb[0].mxu0
        %1610 = vmatprep.mubr.f32.mxu0 0.0
        %1611 = vmatmul.mubr.f32.gmra.mrb[0].mxu0 %v1517
        %v1612 = vpop.f32.mrb[0].mxu0
        %v1613 = vadd.f32 %v1539, %v1612
        %v1614 = vpop.f32.mrb[0].mxu0
        %1615 = vdwg.mxu0
        %v1616 = vadd.f32 %v1076, %v1608
        %v1617 = vadd.f32 %v1077, %v1613
        %v1618 = vld [vmem:[%s820] sm:$0x1]
        %v1619 = vld [vmem:[%s823] sm:$0x1]
        %1620 = vadd.xlane.f32.xlu0 %v1616
        %v1621 = vpop.xlane.xlu0 %1620
        %1622 = vadd.xlane.f32.xlu0 %v1617
        %v1623 = vpop.xlane.xlu0 %1622
        %v1624 = vrcp.pop 128.0
        %v1625 = vmul.f32 %v1621, %v1624
        %v1626 = vmul.f32 %v1623, %v1624
        %v1627 = vmul.f32 %v1616, %v1616
        %v1628 = vmul.f32 %v1617, %v1617
        %1629 = vadd.xlane.f32.xlu0 %v1627
        %v1630 = vpop.xlane.xlu0 %1629
        %1631 = vadd.xlane.f32.xlu0 %v1628
        %v1632 = vpop.xlane.xlu0 %1631
        %v1633 = vmul.f32 %v1630, %v1624
        %v1634 = vmul.f32 %v1632, %v1624
        %v1635 = vmul.f32 %v1625, %v1625
        %v1636 = vmul.f32 %v1626, %v1626
        %v1637 = vsub.f32 %v1633, %v1635
        %v1638 = vsub.f32 %v1634, %v1636
        %v1639 = vsub.f32 %v1616, %v1625
        %v1640 = vsub.f32 %v1617, %v1626
        %v1641 = vadd.f32 %v1637, 1e-05
        %v1642 = vadd.f32 %v1638, 1e-05
        %v1643 = vrsqrt.pop %v1641
        %v1644 = vrsqrt.pop %v1642
        %v1645 = vmul.f32 %v1639, %v1643
        %v1646 = vmul.f32 %v1640, %v1644
        %v1648 = vlaneseq
        %v1649 = vshrl.u32 %v1648, 7
        %v1650 = vsub.s32 0, %v1649
        %v1651 = vrot.slane %v1618, %v1650
        %v1653 = vmul.f32 %v1645, %v1651
        %v1654 = vmul.f32 %v1646, %v1651
        %v1656 = vlaneseq
        %v1657 = vshrl.u32 %v1656, 7
        %v1658 = vsub.s32 0, %v1657
        %v1659 = vrot.slane %v1619, %v1658
        %v1661 = vadd.f32 %v1653, %v1659
        %v1662 = vadd.f32 %v1654, %v1659
        %v1663 = vld [vmem:[%s714] sm:$0xff]
        %v1664 = vld [vmem:[%s714 + $0x8] sm:$0xff]
        %v1665 = vld [vmem:[%s714 + $0x10] sm:$0xff]
        %v1666 = vld [vmem:[%s714 + $0x18] sm:$0xff]
        %v1667 = vld [vmem:[%s714 + $0x20] sm:$0xff]
        %v1668 = vld [vmem:[%s714 + $0x28] sm:$0xff]
        %v1669 = vld [vmem:[%s714 + $0x30] sm:$0xff]
        %v1670 = vld [vmem:[%s714 + $0x38] sm:$0xff]
        %v1671 = vld [vmem:[%s714 + $0x40] sm:$0xff]
        %v1672 = vld [vmem:[%s714 + $0x48] sm:$0xff]
        %v1673 = vld [vmem:[%s714 + $0x50] sm:$0xff]
        %v1674 = vld [vmem:[%s714 + $0x58] sm:$0xff]
        %v1675 = vld [vmem:[%s714 + $0x60] sm:$0xff]
        %v1676 = vld [vmem:[%s714 + $0x68] sm:$0xff]
        %v1677 = vld [vmem:[%s714 + $0x70] sm:$0xff]
        %v1678 = vld [vmem:[%s714 + $0x78] sm:$0xff]
        %v1679 = vld [vmem:[%s714 + $0x80] sm:$0xff]
        %v1680 = vld [vmem:[%s714 + $0x88] sm:$0xff]
        %v1681 = vld [vmem:[%s714 + $0x90] sm:$0xff]
        %v1682 = vld [vmem:[%s714 + $0x98] sm:$0xff]
        %v1683 = vld [vmem:[%s714 + $0xa0] sm:$0xff]
        %v1684 = vld [vmem:[%s714 + $0xa8] sm:$0xff]
        %v1685 = vld [vmem:[%s714 + $0xb0] sm:$0xff]
        %v1686 = vld [vmem:[%s714 + $0xb8] sm:$0xff]
        %v1687 = vld [vmem:[%s714 + $0xc0] sm:$0xff]
        %v1688 = vld [vmem:[%s714 + $0xc8] sm:$0xff]
        %v1689 = vld [vmem:[%s714 + $0xd0] sm:$0xff]
        %v1690 = vld [vmem:[%s714 + $0xd8] sm:$0xff]
        %v1691 = vld [vmem:[%s714 + $0xe0] sm:$0xff]
        %v1692 = vld [vmem:[%s714 + $0xe8] sm:$0xff]
        %v1693 = vld [vmem:[%s714 + $0xf0] sm:$0xff]
        %v1694 = vld [vmem:[%s714 + $0xf8] sm:$0xff]
        %v1695 = vld [vmem:[%s714 + $0x100] sm:$0xff]
        %v1696 = vld [vmem:[%s714 + $0x108] sm:$0xff]
        %v1697 = vld [vmem:[%s714 + $0x110] sm:$0xff]
        %v1698 = vld [vmem:[%s714 + $0x118] sm:$0xff]
        %v1699 = vld [vmem:[%s714 + $0x120] sm:$0xff]
        %v1700 = vld [vmem:[%s714 + $0x128] sm:$0xff]
        %v1701 = vld [vmem:[%s714 + $0x130] sm:$0xff]
        %v1702 = vld [vmem:[%s714 + $0x138] sm:$0xff]
        %v1703 = vld [vmem:[%s714 + $0x140] sm:$0xff]
        %v1704 = vld [vmem:[%s714 + $0x148] sm:$0xff]
        %v1705 = vld [vmem:[%s714 + $0x150] sm:$0xff]
        %v1706 = vld [vmem:[%s714 + $0x158] sm:$0xff]
        %v1707 = vld [vmem:[%s714 + $0x160] sm:$0xff]
        %v1708 = vld [vmem:[%s714 + $0x168] sm:$0xff]
        %v1709 = vld [vmem:[%s714 + $0x170] sm:$0xff]
        %v1710 = vld [vmem:[%s714 + $0x178] sm:$0xff]
        %v1711 = vld [vmem:[%s714 + $0x180] sm:$0xff]
        %v1712 = vld [vmem:[%s714 + $0x188] sm:$0xff]
        %v1713 = vld [vmem:[%s714 + $0x190] sm:$0xff]
        %v1714 = vld [vmem:[%s714 + $0x198] sm:$0xff]
        %v1715 = vld [vmem:[%s714 + $0x1a0] sm:$0xff]
        %v1716 = vld [vmem:[%s714 + $0x1a8] sm:$0xff]
        %v1717 = vld [vmem:[%s714 + $0x1b0] sm:$0xff]
        %v1718 = vld [vmem:[%s714 + $0x1b8] sm:$0xff]
        %v1719 = vld [vmem:[%s714 + $0x1c0] sm:$0xff]
        %v1720 = vld [vmem:[%s714 + $0x1c8] sm:$0xff]
        %v1721 = vld [vmem:[%s714 + $0x1d0] sm:$0xff]
        %v1722 = vld [vmem:[%s714 + $0x1d8] sm:$0xff]
        %v1723 = vld [vmem:[%s714 + $0x1e0] sm:$0xff]
        %v1724 = vld [vmem:[%s714 + $0x1e8] sm:$0xff]
        %v1725 = vld [vmem:[%s714 + $0x1f0] sm:$0xff]
        %v1726 = vld [vmem:[%s714 + $0x1f8] sm:$0xff]
        %v1727 = vld [vmem:[%s827] sm:$0xf]
        %v1729 = vlaneseq
        %v1730 = vshrl.u32 %v1729, 7
        %v1731 = vsub.s32 0, %v1730
        %v1732 = vrot.slane %v1727, %v1731
        %v1733 = vlaneseq
        %v1734 = vshrl.u32 %v1733, 7
        %v1735 = vsub.s32 1, %v1734
        %v1736 = vrot.slane %v1727, %v1735
        %v1737 = vlaneseq
        %v1738 = vshrl.u32 %v1737, 7
        %v1739 = vsub.s32 2, %v1738
        %v1740 = vrot.slane %v1727, %v1739
        %v1741 = vlaneseq
        %v1742 = vshrl.u32 %v1741, 7
        %v1743 = vsub.s32 3, %v1742
        %v1744 = vrot.slane %v1727, %v1743
        %1749 = vmatprep.subr.mxu0 %v1664
        %1750 = vmatpush1.msra.mxu0 %v1663
        %1751 = vmatprep.subr.mxu0 %v1668
        %1752 = vmatpush1.msra.mxu0 %v1667
        %1753 = vmatprep.subr.mxu0 %v1672
        %1754 = vmatpush1.msra.mxu0 %v1671
        %1755 = vmatprep.subr.mxu0 %v1676
        %1756 = vmatpush1.msra.mxu0 %v1675
        %1757 = vmatprep.subr.mxu0 %v1680
        %1758 = vmatpush1.msra.mxu0 %v1679
        %1759 = vmatprep.subr.mxu0 %v1684
        %1760 = vmatpush1.msra.mxu0 %v1683
        %1761 = vmatprep.subr.mxu0 %v1688
        %1762 = vmatpush1.msra.mxu0 %v1687
        %1763 = vmatprep.subr.mxu0 %v1692
        %1764 = vmatpush1.msra.mxu0 %v1691
        %1765 = vmatprep.subr.mxu0 %v1696
        %1766 = vmatpush1.msra.mxu0 %v1695
        %1767 = vmatprep.subr.mxu0 %v1700
        %1768 = vmatpush1.msra.mxu0 %v1699
        %1769 = vmatprep.subr.mxu0 %v1704
        %1770 = vmatpush1.msra.mxu0 %v1703
        %1771 = vmatprep.subr.mxu0 %v1708
        %1772 = vmatpush1.msra.mxu0 %v1707
        %1773 = vmatprep.subr.mxu0 %v1712
        %1774 = vmatpush1.msra.mxu0 %v1711
        %1775 = vmatprep.subr.mxu0 %v1716
        %1776 = vmatpush1.msra.mxu0 %v1715
        %1777 = vmatprep.subr.mxu0 %v1720
        %1778 = vmatpush1.msra.mxu0 %v1719
        %1779 = vmatprep.subr.mxu0 %v1724
        %1780 = vmatpush1.msra.mxu0 %v1723
        %1781 = vmatprep.subr.mxu0 0.0
        %1782 = vmatpush1.msra.mxu0 0.0
        %1783 = vmatprep.subr.mxu0 0.0
        %1784 = vmatpush1.msra.mxu0 0.0
        %1785 = vmatprep.subr.mxu0 0.0
        %1786 = vmatpush1.msra.mxu0 0.0
        %1787 = vmatprep.subr.mxu0 0.0
        %1788 = vmatpush1.msra.mxu0 0.0
        %1789 = vmatprep.subr.mxu0 0.0
        %1790 = vmatpush1.msra.mxu0 0.0
        %1791 = vmatprep.subr.mxu0 0.0
        %1792 = vmatpush1.msra.mxu0 0.0
        %1793 = vmatprep.subr.mxu0 0.0
        %1794 = vmatpush1.msra.mxu0 0.0
        %1795 = vmatprep.subr.mxu0 0.0
        %1796 = vmatpush1.msra.mxu0 0.0
        %1797 = vmatprep.subr.mxu0 0.0
        %1798 = vmatpush1.msra.mxu0 0.0
        %1799 = vmatprep.subr.mxu0 0.0
        %1800 = vmatpush1.msra.mxu0 0.0
        %1801 = vmatprep.subr.mxu0 0.0
        %1802 = vmatpush1.msra.mxu0 0.0
        %1803 = vmatprep.subr.mxu0 0.0
        %1804 = vmatpush1.msra.mxu0 0.0
        %1805 = vmatprep.subr.mxu0 0.0
        %1806 = vmatpush1.msra.mxu0 0.0
        %1807 = vmatprep.subr.mxu0 0.0
        %1808 = vmatpush1.msra.mxu0 0.0
        %1809 = vmatprep.subr.mxu0 0.0
        %1810 = vmatpush1.msra.mxu0 0.0
        %1811 = vmatprep.subr.mxu0 0.0
        %1812 = vmatpush1.msra.mxu0 0.0
        %1813 = vmatprep.mubr.f32.mxu0 0.0
        %1814 = vmatmul.mubr.f32.gmra.mrb[0].mxu0 %v1661
        %v1815 = vpop.f32.mrb[0].mxu0
        %v1816 = vadd.f32 %v1732, %v1815
        %v1817 = vpop.f32.mrb[0].mxu0
        %v1818 = vadd.f32 %v1736, %v1817
        %1819 = vmatprep.mubr.f32.mxu0 0.0
        %1820 = vmatmul.mubr.f32.gmra.mrb[0].mxu0 %v1662
        %v1821 = vpop.f32.mrb[0].mxu0
        %v1822 = vadd.f32 %v1732, %v1821
        %v1823 = vpop.f32.mrb[0].mxu0
        %v1824 = vadd.f32 %v1736, %v1823
        %1825 = vdwg.mxu0
        %1826 = vmatprep.subr.mxu0 %v1666
        %1827 = vmatpush1.msra.mxu0 %v1665
        %1828 = vmatprep.subr.mxu0 %v1670
        %1829 = vmatpush1.msra.mxu0 %v1669
        %1830 = vmatprep.subr.mxu0 %v1674
        %1831 = vmatpush1.msra.mxu0 %v1673
        %1832 = vmatprep.subr.mxu0 %v1678
        %1833 = vmatpush1.msra.mxu0 %v1677
        %1834 = vmatprep.subr.mxu0 %v1682
        %1835 = vmatpush1.msra.mxu0 %v1681
        %1836 = vmatprep.subr.mxu0 %v1686
        %1837 = vmatpush1.msra.mxu0 %v1685
        %1838 = vmatprep.subr.mxu0 %v1690
        %1839 = vmatpush1.msra.mxu0 %v1689
        %1840 = vmatprep.subr.mxu0 %v1694
        %1841 = vmatpush1.msra.mxu0 %v1693
        %1842 = vmatprep.subr.mxu0 %v1698
        %1843 = vmatpush1.msra.mxu0 %v1697
        %1844 = vmatprep.subr.mxu0 %v1702
        %1845 = vmatpush1.msra.mxu0 %v1701
        %1846 = vmatprep.subr.mxu0 %v1706
        %1847 = vmatpush1.msra.mxu0 %v1705
        %1848 = vmatprep.subr.mxu0 %v1710
        %1849 = vmatpush1.msra.mxu0 %v1709
        %1850 = vmatprep.subr.mxu0 %v1714
        %1851 = vmatpush1.msra.mxu0 %v1713
        %1852 = vmatprep.subr.mxu0 %v1718
        %1853 = vmatpush1.msra.mxu0 %v1717
        %1854 = vmatprep.subr.mxu0 %v1722
        %1855 = vmatpush1.msra.mxu0 %v1721
        %1856 = vmatprep.subr.mxu0 %v1726
        %1857 = vmatpush1.msra.mxu0 %v1725
        %1858 = vmatprep.subr.mxu0 0.0
        %1859 = vmatpush1.msra.mxu0 0.0
        %1860 = vmatprep.subr.mxu0 0.0
        %1861 = vmatpush1.msra.mxu0 0.0
        %1862 = vmatprep.subr.mxu0 0.0
        %1863 = vmatpush1.msra.mxu0 0.0
        %1864 = vmatprep.subr.mxu0 0.0
        %1865 = vmatpush1.msra.mxu0 0.0
        %1866 = vmatprep.subr.mxu0 0.0
        %1867 = vmatpush1.msra.mxu0 0.0
        %1868 = vmatprep.subr.mxu0 0.0
        %1869 = vmatpush1.msra.mxu0 0.0
        %1870 = vmatprep.subr.mxu0 0.0
        %1871 = vmatpush1.msra.mxu0 0.0
        %1872 = vmatprep.subr.mxu0 0.0
        %1873 = vmatpush1.msra.mxu0 0.0
        %1874 = vmatprep.subr.mxu0 0.0
        %1875 = vmatpush1.msra.mxu0 0.0
        %1876 = vmatprep.subr.mxu0 0.0
        %1877 = vmatpush1.msra.mxu0 0.0
        %1878 = vmatprep.subr.mxu0 0.0
        %1879 = vmatpush1.msra.mxu0 0.0
        %1880 = vmatprep.subr.mxu0 0.0
        %1881 = vmatpush1.msra.mxu0 0.0
        %1882 = vmatprep.subr.mxu0 0.0
        %1883 = vmatpush1.msra.mxu0 0.0
        %1884 = vmatprep.subr.mxu0 0.0
        %1885 = vmatpush1.msra.mxu0 0.0
        %1886 = vmatprep.subr.mxu0 0.0
        %1887 = vmatpush1.msra.mxu0 0.0
        %1888 = vmatprep.subr.mxu0 0.0
        %1889 = vmatpush1.msra.mxu0 0.0
        %1890 = vmatprep.mubr.f32.mxu0 0.0
        %1891 = vmatmul.mubr.f32.gmra.mrb[0].mxu0 %v1661
        %v1892 = vpop.f32.mrb[0].mxu0
        %v1893 = vadd.f32 %v1740, %v1892
        %v1894 = vpop.f32.mrb[0].mxu0
        %v1895 = vadd.f32 %v1744, %v1894
        %1896 = vmatprep.mubr.f32.mxu0 0.0
        %1897 = vmatmul.mubr.f32.gmra.mrb[0].mxu0 %v1662
        %v1898 = vpop.f32.mrb[0].mxu0
        %v1899 = vadd.f32 %v1740, %v1898
        %v1900 = vpop.f32.mrb[0].mxu0
        %v1901 = vadd.f32 %v1744, %v1900
        %1902 = vdwg.mxu0
        %v1903 = vmax.f32 %v1816, 0.0
        %v1904 = vmax.f32 %v1818, 0.0
        %v1905 = vmax.f32 %v1893, 0.0
        %v1906 = vmax.f32 %v1895, 0.0
        %v1907 = vmax.f32 %v1822, 0.0
        %v1908 = vmax.f32 %v1824, 0.0
        %v1909 = vmax.f32 %v1899, 0.0
        %v1910 = vmax.f32 %v1901, 0.0
        %v1911 = vld [vmem:[%s723] sm:$0xff]
        %v1912 = vld [vmem:[%s723 + $0x8] sm:$0xff]
        %v1913 = vld [vmem:[%s723 + $0x10] sm:$0xff]
        %v1914 = vld [vmem:[%s723 + $0x18] sm:$0xff]
        %v1915 = vld [vmem:[%s723 + $0x20] sm:$0xff]
        %v1916 = vld [vmem:[%s723 + $0x28] sm:$0xff]
        %v1917 = vld [vmem:[%s723 + $0x30] sm:$0xff]
        %v1918 = vld [vmem:[%s723 + $0x38] sm:$0xff]
        %v1919 = vld [vmem:[%s723 + $0x40] sm:$0xff]
        %v1920 = vld [vmem:[%s723 + $0x48] sm:$0xff]
        %v1921 = vld [vmem:[%s723 + $0x50] sm:$0xff]
        %v1922 = vld [vmem:[%s723 + $0x58] sm:$0xff]
        %v1923 = vld [vmem:[%s723 + $0x60] sm:$0xff]
        %v1924 = vld [vmem:[%s723 + $0x68] sm:$0xff]
        %v1925 = vld [vmem:[%s723 + $0x70] sm:$0xff]
        %v1926 = vld [vmem:[%s723 + $0x78] sm:$0xff]
        %v1927 = vld [vmem:[%s723 + $0x80] sm:$0xff]
        %v1928 = vld [vmem:[%s723 + $0x88] sm:$0xff]
        %v1929 = vld [vmem:[%s723 + $0x90] sm:$0xff]
        %v1930 = vld [vmem:[%s723 + $0x98] sm:$0xff]
        %v1931 = vld [vmem:[%s723 + $0xa0] sm:$0xff]
        %v1932 = vld [vmem:[%s723 + $0xa8] sm:$0xff]
        %v1933 = vld [vmem:[%s723 + $0xb0] sm:$0xff]
        %v1934 = vld [vmem:[%s723 + $0xb8] sm:$0xff]
        %v1935 = vld [vmem:[%s723 + $0xc0] sm:$0xff]
        %v1936 = vld [vmem:[%s723 + $0xc8] sm:$0xff]
        %v1937 = vld [vmem:[%s723 + $0xd0] sm:$0xff]
        %v1938 = vld [vmem:[%s723 + $0xd8] sm:$0xff]
        %v1939 = vld [vmem:[%s723 + $0xe0] sm:$0xff]
        %v1940 = vld [vmem:[%s723 + $0xe8] sm:$0xff]
        %v1941 = vld [vmem:[%s723 + $0xf0] sm:$0xff]
        %v1942 = vld [vmem:[%s723 + $0xf8] sm:$0xff]
        %v1943 = vld [vmem:[%s723 + $0x100] sm:$0xff]
        %v1944 = vld [vmem:[%s723 + $0x108] sm:$0xff]
        %v1945 = vld [vmem:[%s723 + $0x110] sm:$0xff]
        %v1946 = vld [vmem:[%s723 + $0x118] sm:$0xff]
        %v1947 = vld [vmem:[%s723 + $0x120] sm:$0xff]
        %v1948 = vld [vmem:[%s723 + $0x128] sm:$0xff]
        %v1949 = vld [vmem:[%s723 + $0x130] sm:$0xff]
        %v1950 = vld [vmem:[%s723 + $0x138] sm:$0xff]
        %v1951 = vld [vmem:[%s723 + $0x140] sm:$0xff]
        %v1952 = vld [vmem:[%s723 + $0x148] sm:$0xff]
        %v1953 = vld [vmem:[%s723 + $0x150] sm:$0xff]
        %v1954 = vld [vmem:[%s723 + $0x158] sm:$0xff]
        %v1955 = vld [vmem:[%s723 + $0x160] sm:$0xff]
        %v1956 = vld [vmem:[%s723 + $0x168] sm:$0xff]
        %v1957 = vld [vmem:[%s723 + $0x170] sm:$0xff]
        %v1958 = vld [vmem:[%s723 + $0x178] sm:$0xff]
        %v1959 = vld [vmem:[%s723 + $0x180] sm:$0xff]
        %v1960 = vld [vmem:[%s723 + $0x188] sm:$0xff]
        %v1961 = vld [vmem:[%s723 + $0x190] sm:$0xff]
        %v1962 = vld [vmem:[%s723 + $0x198] sm:$0xff]
        %v1963 = vld [vmem:[%s723 + $0x1a0] sm:$0xff]
        %v1964 = vld [vmem:[%s723 + $0x1a8] sm:$0xff]
        %v1965 = vld [vmem:[%s723 + $0x1b0] sm:$0xff]
        %v1966 = vld [vmem:[%s723 + $0x1b8] sm:$0xff]
        %v1967 = vld [vmem:[%s723 + $0x1c0] sm:$0xff]
        %v1968 = vld [vmem:[%s723 + $0x1c8] sm:$0xff]
        %v1969 = vld [vmem:[%s723 + $0x1d0] sm:$0xff]
        %v1970 = vld [vmem:[%s723 + $0x1d8] sm:$0xff]
        %v1971 = vld [vmem:[%s723 + $0x1e0] sm:$0xff]
        %v1972 = vld [vmem:[%s723 + $0x1e8] sm:$0xff]
        %v1973 = vld [vmem:[%s723 + $0x1f0] sm:$0xff]
        %v1974 = vld [vmem:[%s723 + $0x1f8] sm:$0xff]
        %v1975 = vld [vmem:[%s830] sm:$0x1]
        %v1977 = vlaneseq
        %v1978 = vshrl.u32 %v1977, 7
        %v1979 = vsub.s32 0, %v1978
        %v1980 = vrot.slane %v1975, %v1979
        %1982 = vmatprep.subr.mxu0 0.0
        %1983 = vmatpush1.msra.mxu0 %v1911
        %1984 = vmatprep.subr.mxu0 0.0
        %1985 = vmatpush1.msra.mxu0 %v1912
        %1986 = vmatprep.subr.mxu0 0.0
        %1987 = vmatpush1.msra.mxu0 %v1913
        %1988 = vmatprep.subr.mxu0 0.0
        %1989 = vmatpush1.msra.mxu0 %v1914
        %1990 = vmatprep.subr.mxu0 0.0
        %1991 = vmatpush1.msra.mxu0 %v1915
        %1992 = vmatprep.subr.mxu0 0.0
        %1993 = vmatpush1.msra.mxu0 %v1916
        %1994 = vmatprep.subr.mxu0 0.0
        %1995 = vmatpush1.msra.mxu0 %v1917
        %1996 = vmatprep.subr.mxu0 0.0
        %1997 = vmatpush1.msra.mxu0 %v1918
        %1998 = vmatprep.subr.mxu0 0.0
        %1999 = vmatpush1.msra.mxu0 %v1919
        %2000 = vmatprep.subr.mxu0 0.0
        %2001 = vmatpush1.msra.mxu0 %v1920
        %2002 = vmatprep.subr.mxu0 0.0
        %2003 = vmatpush1.msra.mxu0 %v1921
        %2004 = vmatprep.subr.mxu0 0.0
        %2005 = vmatpush1.msra.mxu0 %v1922
        %2006 = vmatprep.subr.mxu0 0.0
        %2007 = vmatpush1.msra.mxu0 %v1923
        %2008 = vmatprep.subr.mxu0 0.0
        %2009 = vmatpush1.msra.mxu0 %v1924
        %2010 = vmatprep.subr.mxu0 0.0
        %2011 = vmatpush1.msra.mxu0 %v1925
        %2012 = vmatprep.subr.mxu0 0.0
        %2013 = vmatpush1.msra.mxu0 %v1926
        %2014 = vmatprep.subr.mxu0 0.0
        %2015 = vmatpush1.msra.mxu0 %v1927
        %2016 = vmatprep.subr.mxu0 0.0
        %2017 = vmatpush1.msra.mxu0 %v1928
        %2018 = vmatprep.subr.mxu0 0.0
        %2019 = vmatpush1.msra.mxu0 %v1929
        %2020 = vmatprep.subr.mxu0 0.0
        %2021 = vmatpush1.msra.mxu0 %v1930
        %2022 = vmatprep.subr.mxu0 0.0
        %2023 = vmatpush1.msra.mxu0 %v1931
        %2024 = vmatprep.subr.mxu0 0.0
        %2025 = vmatpush1.msra.mxu0 %v1932
        %2026 = vmatprep.subr.mxu0 0.0
        %2027 = vmatpush1.msra.mxu0 %v1933
        %2028 = vmatprep.subr.mxu0 0.0
        %2029 = vmatpush1.msra.mxu0 %v1934
        %2030 = vmatprep.subr.mxu0 0.0
        %2031 = vmatpush1.msra.mxu0 %v1935
        %2032 = vmatprep.subr.mxu0 0.0
        %2033 = vmatpush1.msra.mxu0 %v1936
        %2034 = vmatprep.subr.mxu0 0.0
        %2035 = vmatpush1.msra.mxu0 %v1937
        %2036 = vmatprep.subr.mxu0 0.0
        %2037 = vmatpush1.msra.mxu0 %v1938
        %2038 = vmatprep.subr.mxu0 0.0
        %2039 = vmatpush1.msra.mxu0 %v1939
        %2040 = vmatprep.subr.mxu0 0.0
        %2041 = vmatpush1.msra.mxu0 %v1940
        %2042 = vmatprep.subr.mxu0 0.0
        %2043 = vmatpush1.msra.mxu0 %v1941
        %2044 = vmatprep.subr.mxu0 0.0
        %2045 = vmatpush1.msra.mxu0 %v1942
        %2046 = vmatprep.mubr.f32.mxu0 %v1904
        %2047 = vmatmul.mubr.f32.gmra.mrb[0].mxu0 %v1903
        %v2048 = vpop.f32.mrb[0].mxu0
        %v2049 = vadd.f32 %v1980, %v2048
        %v2050 = vpop.f32.mrb[0].mxu0
        %2051 = vmatprep.mubr.f32.mxu0 %v1908
        %2052 = vmatmul.mubr.f32.gmra.mrb[0].mxu0 %v1907
        %v2053 = vpop.f32.mrb[0].mxu0
        %v2054 = vadd.f32 %v1980, %v2053
        %v2055 = vpop.f32.mrb[0].mxu0
        %2056 = vdwg.mxu0
        %2057 = vmatprep.subr.mxu0 0.0
        %2058 = vmatpush1.msra.mxu0 %v1943
        %2059 = vmatprep.subr.mxu0 0.0
        %2060 = vmatpush1.msra.mxu0 %v1944
        %2061 = vmatprep.subr.mxu0 0.0
        %2062 = vmatpush1.msra.mxu0 %v1945
        %2063 = vmatprep.subr.mxu0 0.0
        %2064 = vmatpush1.msra.mxu0 %v1946
        %2065 = vmatprep.subr.mxu0 0.0
        %2066 = vmatpush1.msra.mxu0 %v1947
        %2067 = vmatprep.subr.mxu0 0.0
        %2068 = vmatpush1.msra.mxu0 %v1948
        %2069 = vmatprep.subr.mxu0 0.0
        %2070 = vmatpush1.msra.mxu0 %v1949
        %2071 = vmatprep.subr.mxu0 0.0
        %2072 = vmatpush1.msra.mxu0 %v1950
        %2073 = vmatprep.subr.mxu0 0.0
        %2074 = vmatpush1.msra.mxu0 %v1951
        %2075 = vmatprep.subr.mxu0 0.0
        %2076 = vmatpush1.msra.mxu0 %v1952
        %2077 = vmatprep.subr.mxu0 0.0
        %2078 = vmatpush1.msra.mxu0 %v1953
        %2079 = vmatprep.subr.mxu0 0.0
        %2080 = vmatpush1.msra.mxu0 %v1954
        %2081 = vmatprep.subr.mxu0 0.0
        %2082 = vmatpush1.msra.mxu0 %v1955
        %2083 = vmatprep.subr.mxu0 0.0
        %2084 = vmatpush1.msra.mxu0 %v1956
        %2085 = vmatprep.subr.mxu0 0.0
        %2086 = vmatpush1.msra.mxu0 %v1957
        %2087 = vmatprep.subr.mxu0 0.0
        %2088 = vmatpush1.msra.mxu0 %v1958
        %2089 = vmatprep.subr.mxu0 0.0
        %2090 = vmatpush1.msra.mxu0 %v1959
        %2091 = vmatprep.subr.mxu0 0.0
        %2092 = vmatpush1.msra.mxu0 %v1960
        %2093 = vmatprep.subr.mxu0 0.0
        %2094 = vmatpush1.msra.mxu0 %v1961
        %2095 = vmatprep.subr.mxu0 0.0
        %2096 = vmatpush1.msra.mxu0 %v1962
        %2097 = vmatprep.subr.mxu0 0.0
        %2098 = vmatpush1.msra.mxu0 %v1963
        %2099 = vmatprep.subr.mxu0 0.0
        %2100 = vmatpush1.msra.mxu0 %v1964
        %2101 = vmatprep.subr.mxu0 0.0
        %2102 = vmatpush1.msra.mxu0 %v1965
        %2103 = vmatprep.subr.mxu0 0.0
        %2104 = vmatpush1.msra.mxu0 %v1966
        %2105 = vmatprep.subr.mxu0 0.0
        %2106 = vmatpush1.msra.mxu0 %v1967
        %2107 = vmatprep.subr.mxu0 0.0
        %2108 = vmatpush1.msra.mxu0 %v1968
        %2109 = vmatprep.subr.mxu0 0.0
        %2110 = vmatpush1.msra.mxu0 %v1969
        %2111 = vmatprep.subr.mxu0 0.0
        %2112 = vmatpush1.msra.mxu0 %v1970
        %2113 = vmatprep.subr.mxu0 0.0
        %2114 = vmatpush1.msra.mxu0 %v1971
        %2115 = vmatprep.subr.mxu0 0.0
        %2116 = vmatpush1.msra.mxu0 %v1972
        %2117 = vmatprep.subr.mxu0 0.0
        %2118 = vmatpush1.msra.mxu0 %v1973
        %2119 = vmatprep.subr.mxu0 0.0
        %2120 = vmatpush1.msra.mxu0 %v1974
        %2121 = vmatprep.mubr.f32.mxu0 %v1906
        %2122 = vmatmul.mubr.f32.gmra.mrb[0].mxu0 %v1905
        %v2123 = vpop.f32.mrb[0].mxu0
        %v2124 = vadd.f32 %v2049, %v2123
        %v2125 = vpop.f32.mrb[0].mxu0
        %2126 = vmatprep.mubr.f32.mxu0 %v1910
        %2127 = vmatmul.mubr.f32.gmra.mrb[0].mxu0 %v1909
        %v2128 = vpop.f32.mrb[0].mxu0
        %v2129 = vadd.f32 %v2054, %v2128
        %v2130 = vpop.f32.mrb[0].mxu0
        %2131 = vdwg.mxu0
        %v2132 = vadd.f32 %v1661, %v2124
        %v2133 = vadd.f32 %v1662, %v2129
        %v2134 = vld [vmem:[%s833] sm:$0x1]
        %v2135 = vld [vmem:[%s836] sm:$0x1]
        %2136 = vadd.xlane.f32.xlu0 %v2132
        %v2137 = vpop.xlane.xlu0 %2136
        %2138 = vadd.xlane.f32.xlu0 %v2133
        %v2139 = vpop.xlane.xlu0 %2138
        %v2140 = vmul.f32 %v2137, %v1624
        %v2141 = vmul.f32 %v2139, %v1624
        %v2142 = vmul.f32 %v2132, %v2132
        %v2143 = vmul.f32 %v2133, %v2133
        %2144 = vadd.xlane.f32.xlu0 %v2142
        %v2145 = vpop.xlane.xlu0 %2144
        %2146 = vadd.xlane.f32.xlu0 %v2143
        %v2147 = vpop.xlane.xlu0 %2146
        %v2148 = vmul.f32 %v2145, %v1624
        %v2149 = vmul.f32 %v2147, %v1624
        %v2150 = vmul.f32 %v2140, %v2140
        %v2151 = vmul.f32 %v2141, %v2141
        %v2152 = vsub.f32 %v2148, %v2150
        %v2153 = vsub.f32 %v2149, %v2151
        %v2154 = vsub.f32 %v2132, %v2140
        %v2155 = vsub.f32 %v2133, %v2141
        %v2156 = vadd.f32 %v2152, 1e-05
        %v2157 = vadd.f32 %v2153, 1e-05
        %v2158 = vrsqrt.pop %v2156
        %v2159 = vrsqrt.pop %v2157
        %v2160 = vmul.f32 %v2154, %v2158
        %v2161 = vmul.f32 %v2155, %v2159
        %v2163 = vlaneseq
        %v2164 = vshrl.u32 %v2163, 7
        %v2165 = vsub.s32 0, %v2164
        %v2166 = vrot.slane %v2134, %v2165
        %v2168 = vmul.f32 %v2160, %v2166
        %v2169 = vmul.f32 %v2161, %v2166
        %v2171 = vlaneseq
        %v2172 = vshrl.u32 %v2171, 7
        %v2173 = vsub.s32 0, %v2172
        %v2174 = vrot.slane %v2135, %v2173
        %v2176 = vadd.f32 %v2168, %v2174
        %v2177 = vadd.f32 %v2169, %v2174
        %2178 = vst [vmem:[#allocation2] sm:$0xff] %v2176
        %2179 = vst [vmem:[#allocation2 + $0x8] sm:$0xff] %v2177
        %p2180 = scmp.eq.s32.totalorder %s39, 2
        // Predicated region
        $region121: #{tpu_custom_call.1} parent=87 // pred_check
          %p2181 = pneg %p2180
        $region122: #{tpu_custom_call.1} parent=87 // pred_check_branch
          %2183 = sbr.rel (%p2181) target = $region124
        $region123: #{tpu_custom_call.1} parent=87 // pred_region
          %v2184 = vld [vmem:[#allocation14] sm:$0xff]
          %v2185 = vld [vmem:[#allocation14 + $0x8] sm:$0xff]
          %v2186 = vld [vmem:[#allocation14 + $0x10] sm:$0xff]
          %v2187 = vld [vmem:[#allocation14 + $0x18] sm:$0xff]
          %v2188 = vld [vmem:[#allocation14 + $0x20] sm:$0xff]
          %v2189 = vld [vmem:[#allocation14 + $0x28] sm:$0xff]
          %v2190 = vld [vmem:[#allocation14 + $0x30] sm:$0xff]
          %v2191 = vld [vmem:[#allocation14 + $0x38] sm:$0xff]
          %v2192 = vld [vmem:[#allocation14 + $0x40] sm:$0xff]
          %v2193 = vld [vmem:[#allocation14 + $0x48] sm:$0xff]
          %v2194 = vld [vmem:[#allocation14 + $0x50] sm:$0xff]
          %v2195 = vld [vmem:[#allocation14 + $0x58] sm:$0xff]
          %v2196 = vld [vmem:[#allocation14 + $0x60] sm:$0xff]
          %v2197 = vld [vmem:[#allocation14 + $0x68] sm:$0xff]
          %v2198 = vld [vmem:[#allocation14 + $0x70] sm:$0xff]
          %v2199 = vld [vmem:[#allocation14 + $0x78] sm:$0xff]
          %v2200 = vld [vmem:[%s16] sm:$0x1]
          %v2202 = vlaneseq
          %v2203 = vshrl.u32 %v2202, 7
          %v2204 = vsub.s32 0, %v2203
          %v2205 = vrot.slane %v2200, %v2204
          %2207 = vmatprep.subr.mxu0 0.0
          %2208 = vmatpush1.msra.mxu0 %v2184
          %2209 = vmatprep.subr.mxu0 0.0
          %2210 = vmatpush1.msra.mxu0 %v2185
          %2211 = vmatprep.subr.mxu0 0.0
          %2212 = vmatpush1.msra.mxu0 %v2186
          %2213 = vmatprep.subr.mxu0 0.0
          %2214 = vmatpush1.msra.mxu0 %v2187
          %2215 = vmatprep.subr.mxu0 0.0
          %2216 = vmatpush1.msra.mxu0 %v2188
          %2217 = vmatprep.subr.mxu0 0.0
          %2218 = vmatpush1.msra.mxu0 %v2189
          %2219 = vmatprep.subr.mxu0 0.0
          %2220 = vmatpush1.msra.mxu0 %v2190
          %2221 = vmatprep.subr.mxu0 0.0
          %2222 = vmatpush1.msra.mxu0 %v2191
          %2223 = vmatprep.subr.mxu0 0.0
          %2224 = vmatpush1.msra.mxu0 %v2192
          %2225 = vmatprep.subr.mxu0 0.0
          %2226 = vmatpush1.msra.mxu0 %v2193
          %2227 = vmatprep.subr.mxu0 0.0
          %2228 = vmatpush1.msra.mxu0 %v2194
          %2229 = vmatprep.subr.mxu0 0.0
          %2230 = vmatpush1.msra.mxu0 %v2195
          %2231 = vmatprep.subr.mxu0 0.0
          %2232 = vmatpush1.msra.mxu0 %v2196
          %2233 = vmatprep.subr.mxu0 0.0
          %2234 = vmatpush1.msra.mxu0 %v2197
          %2235 = vmatprep.subr.mxu0 0.0
          %2236 = vmatpush1.msra.mxu0 %v2198
          %2237 = vmatprep.subr.mxu0 0.0
          %2238 = vmatpush1.msra.mxu0 %v2199
          %2239 = vmatprep.subr.mxu0 0.0
          %2240 = vmatpush1.msra.mxu0 0.0
          %2241 = vmatprep.subr.mxu0 0.0
          %2242 = vmatpush1.msra.mxu0 0.0
          %2243 = vmatprep.subr.mxu0 0.0
          %2244 = vmatpush1.msra.mxu0 0.0
          %2245 = vmatprep.subr.mxu0 0.0
          %2246 = vmatpush1.msra.mxu0 0.0
          %2247 = vmatprep.subr.mxu0 0.0
          %2248 = vmatpush1.msra.mxu0 0.0
          %2249 = vmatprep.subr.mxu0 0.0
          %2250 = vmatpush1.msra.mxu0 0.0
          %2251 = vmatprep.subr.mxu0 0.0
          %2252 = vmatpush1.msra.mxu0 0.0
          %2253 = vmatprep.subr.mxu0 0.0
          %2254 = vmatpush1.msra.mxu0 0.0
          %2255 = vmatprep.subr.mxu0 0.0
          %2256 = vmatpush1.msra.mxu0 0.0
          %2257 = vmatprep.subr.mxu0 0.0
          %2258 = vmatpush1.msra.mxu0 0.0
          %2259 = vmatprep.subr.mxu0 0.0
          %2260 = vmatpush1.msra.mxu0 0.0
          %2261 = vmatprep.subr.mxu0 0.0
          %2262 = vmatpush1.msra.mxu0 0.0
          %2263 = vmatprep.subr.mxu0 0.0
          %2264 = vmatpush1.msra.mxu0 0.0
          %2265 = vmatprep.subr.mxu0 0.0
          %2266 = vmatpush1.msra.mxu0 0.0
          %2267 = vmatprep.subr.mxu0 0.0
          %2268 = vmatpush1.msra.mxu0 0.0
          %2269 = vmatprep.subr.mxu0 0.0
          %2270 = vmatpush1.msra.mxu0 0.0
          %2271 = vmatprep.mubr.f32.mxu0 0.0
          %2272 = vmatmul.mubr.f32.gmra.mrb[0].mxu0 %v2176
          %v2273 = vpop.f32.mrb[0].mxu0
          %v2274 = vadd.f32 %v2205, %v2273
          %v2275 = vpop.f32.mrb[0].mxu0
          %2276 = vmatprep.mubr.f32.mxu0 0.0
          %2277 = vmatmul.mubr.f32.gmra.mrb[0].mxu0 %v2177
          %v2278 = vpop.f32.mrb[0].mxu0
          %v2279 = vadd.f32 %v2205, %v2278
          %v2280 = vpop.f32.mrb[0].mxu0
          %2281 = vdwg.mxu0
          %2282 = vst [vmem:[#allocation15] sm:$0xff] %v2274
          %2283 = vst [vmem:[#allocation15 + $0x8] sm:$0xff] %v2279
        $region124: #{tpu_custom_call.1} parent=87 // pred_fallthru
          _
        // Predicated region
        $region125: #{tpu_custom_call.1} parent=87 // pred_check
          %p2284 = pneg %p469
        $region126: #{tpu_custom_call.1} parent=87 // pred_check_branch
          %2286 = sbr.rel (%p2284) target = $region128
        $region127: #{tpu_custom_call.1} parent=87 // pred_region
          %s2288 = ssub.s32 256, 256
          %2289 = vsyncadd [#allocation5], %s2288
          %s2290 = sshll.u32 [#allocation15], 4
          %s2291 = int_to_ptr.vmem [resolvable:$true] %s2290
          %2296 = dma.vmem_to_hbm [thread:$0]  %s2291, 256, %s17, [#allocation5], 128, 128, 8
        $region128: #{tpu_custom_call.1} parent=87 // pred_fallthru
          _
        // Predicated region
        $region129: #{tpu_custom_call.1} parent=87 // pred_check
          %p2297 = pneg %p469
        $region130: #{tpu_custom_call.1} parent=87 // pred_check_branch
          %2299 = sbr.rel (%p2297) target = $region132
        $region131: #{tpu_custom_call.1} parent=87 // pred_region
          %2300 = dma.done [#allocation5], 256
        $region132: #{tpu_custom_call.1} parent=87 // pred_fallthru
          _
      $region88: #{tpu_custom_call.1} parent=5 // pred_fallthru
        _
      %p2301 = scmp.le.s32.totalorder 2, %s34
      // Predicated region
      $region133: #{tpu_custom_call.1} parent=5 // pred_check
        %p2302 = pneg %p2301
      $region134: #{tpu_custom_call.1} parent=5 // pred_check_branch
        %2304 = sbr.rel (%p2302) target = $region136
      $region135: #{tpu_custom_call.1} parent=5 // pred_region
        %s2305 = ssub.s32 %s34, 2
      $region136: #{tpu_custom_call.1} parent=5 // pred_fallthru
        _
    $region6: #{tpu_custom_call.1} parent=1 // loop_footer
      %s38 = sadd.s32 1, %s34
    $region7: #{tpu_custom_call.1} parent=1 // loop_footer_branch
      %33 = sbr.rel target = $region3
    $region8: #{tpu_custom_call.1} parent=1 // loop_exit
      _
    %2306 = vsyncpa [#allocation4], 1
    %s2307 = scalar_lea.sflag [#allocation4], 1
    %2308 = vsyncpa %s2307, 1
    %2309 = vsyncpa [#allocation7], 1
    %s2310 = scalar_lea.sflag [#allocation7], 1
    %2311 = vsyncpa %s2310, 1
    %2312 = vsyncpa [#allocation10], 1
    %s2313 = scalar_lea.sflag [#allocation10], 1
    %2314 = vsyncpa %s2313, 1
    %2315 = vsyncpa [#allocation13], 1
    %s2316 = scalar_lea.sflag [#allocation13], 1
    %2317 = vsyncpa %s2316, 1
    %2318 = vsyncpa [#allocation5], 1
    %s2319 = scalar_lea.sflag [#allocation5], 1
    %2320 = vsyncpa %s2319, 1

</llo_original>
